<compile_context>
chip_gen: v7x
topology: tpu7x:2x2x1
jax: 0.10.0
libtpu: 0.0.40
codegen_flags: <defaults>
</compile_context>

<pallas_src>
import functools
import math

import jax
import jax.numpy as jnp
import numpy as np
from jax.experimental import pallas as pl
from jax.experimental.pallas import tpu as pltpu

_SQRT2 = math.sqrt(2.0)
_NEG_SLOPE = 0.2
_EPS = 1e-8


def _tap_table(col, pidx, *, H, W):
    """Per-tap (lane-roll shift, validity mask) for a 3x3 'same' conv.

    Built ONCE per grid step and shared by conv1 and conv2 (identical HxW grid).
    Tap t = (dy+1)*3 + (dx+1) reads x[:, h+dy, w+dx] (zero outside the image).
    """
    HW = H * W
    top = pidx >= W            # h - 1 >= 0
    bot = pidx < HW - W        # h + 1 <= H - 1
    lef = col >= 1             # w - 1 >= 0
    rig = col < W - 1          # w + 1 <= W - 1
    row_ok = {-1: top, 0: None, 1: bot}
    col_ok = {-1: lef, 0: None, 1: rig}
    taps = []
    for dy in (-1, 0, 1):
        for dx in (-1, 0, 1):
            d = dy * W + dx                      # want tap[p] = x[p + d]
            vr, vc = row_ok[dy], col_ok[dx]
            if vr is None:
                valid = vc
            elif vc is None:
                valid = vr
            else:
                valid = jnp.logical_and(vr, vc)
            taps.append(((-d) % HW, valid))      # roll by -d (jnp.roll semantics)
    return taps


def _conv3x3_acc(x_mod, w_ref, taps):
    """'same' 3x3 conv as 9 accumulated tap matmuls: acc += W_t @ roll_mask(x_mod).

    No im2col scratch: each tap is rolled/masked and fed straight to the MXU, so
    activation taps never round-trip VMEM.

    x_mod: (cin, HW) f32 (already modulated).  w_ref: (9, cout, cin) bf16 VMEM.
    Returns (cout, HW) f32.
    """
    acc = None
    for t, (shift, valid) in enumerate(taps):
        tap = x_mod if shift == 0 else pltpu.roll(x_mod, shift=shift, axis=1)
        if valid is not None:
            tap = jnp.where(valid, tap, 0.0)
        # TODO(synk): on v6e/v7x cast x_mod to bf16 once before the tap loop to
        # halve roll/select traffic; kept f32 here for v5e-safe lowering.
        part = jnp.dot(w_ref[t], tap.astype(jnp.bfloat16),
                       preferred_element_type=jnp.float32)
        acc = part if acc is None else acc + part
    return acc


def _styled_res_block_kernel(x_ref, nz_ref, s1_ref, vo_ref, w1_ref, w2_ref,
                             wsk_ref, ab_ref, o_ref, *, H, W):
    HW = H * W
    x = x_ref[0]                       # (cin, HW)  f32
    nz = nz_ref[0]                     # (2, HW)    f32  pre-scaled noise rows
    s1 = s1_ref[0]                     # (cin, 1)   f32  conv1 input scales
    vo = vo_ref[0]                     # (cout, 3)  f32  [s2 | sqrt2*demod1 | demod2]
    ab = ab_ref[...]                   # (cout, 2)  f32  [sqrt2*bias1 | bias2]

    s2, d1, d2 = vo[:, 0:1], vo[:, 1:2], vo[:, 2:3]
    ab1, ab2 = ab[:, 0:1], ab[:, 1:2]
    nz1, nz2 = nz[0:1, :], nz[1:2, :]

    # Flat spatial / column indices + the 8 boundary masks, built once per step.
    pidx = jax.lax.broadcasted_iota(jnp.int32, (1, HW), 1)
    col = (pidx & (W - 1)) if (W & (W - 1)) == 0 else (pidx % W)
    taps = _tap_table(col, pidx, H=H, W=W)

    # conv1: modulated 3x3 conv (scale-input / scale-output trick) + noise + bias
    # + leaky-ReLU.  The sqrt(2) activation gain is pre-folded into d1/nz1/ab1.
    z1 = _conv3x3_acc(x * s1, w1_ref, taps) * d1 + nz1 + ab1
    out1 = jnp.where(z1 >= 0.0, z1, _NEG_SLOPE * z1)

    # conv2: its sqrt(2) gain cancels the final 1/sqrt(2) residual scale, so no
    # gain here; the 1/sqrt(2) is folded into the bf16 skip weight instead.
    z2 = _conv3x3_acc(out1 * s2, w2_ref, taps) * d2 + nz2 + ab2
    out2 = jnp.where(z2 >= 0.0, z2, _NEG_SLOPE * z2)

    # 1x1 EqualConv2d skip (bias=False, no activation), weight pre-scaled by
    # 1/sqrt(2); residual combine needs no extra multiply.
    skip = jnp.dot(wsk_ref[...], x.astype(jnp.bfloat16),
                   preferred_element_type=jnp.float32)
    o_ref[0] = (out2 + skip).astype(o_ref.dtype)


@jax.jit
def styled_res_block(x_nchw, style, noise_nchw, params):
    """Forward of StyledResBlock(in_ch, out_ch, style_dim, upsample=False)."""
    B, cin, H, W = x_nchw.shape
    HW = H * W
    c1, c2, sk = params["conv1"], params["conv2"], params["skip"]
    cout = c1["wsq_t"].shape[0]
    hi = jax.lax.Precision.HIGHEST

    # ---- hoisted modulation / demodulation (tiny batched f32 matmuls) ----
    s1 = jnp.dot(style, c1["mod_w"].T, precision=hi) + c1["mod_b"][:, 0][None]  # (B,cin)
    s2 = jnp.dot(style, c2["mod_w"].T, precision=hi) + c2["mod_b"][:, 0][None]  # (B,cout)
    d1 = jax.lax.rsqrt(jnp.dot(s1 * s1, c1["wsq_t"].T, precision=hi) + _EPS)    # (B,cout)
    d2 = jax.lax.rsqrt(jnp.dot(s2 * s2, c2["wsq_t"].T, precision=hi) + _EPS)    # (B,cout)

    # ---- merge tiny per-channel operands; fold the sqrt(2) gains ----
    vec_o = jnp.stack([s2, _SQRT2 * d1, d2], axis=-1)                    # (B, cout, 3)
    s1_col = s1[:, :, None]                                              # (B, cin, 1)
    act_b = jnp.concatenate([_SQRT2 * c1["act_b"], c2["act_b"]], axis=1)  # (cout, 2)

    noise_flat = noise_nchw.reshape(B, 1, HW)
    nz = jnp.concatenate([_SQRT2 * c1["noise_w"][0, 0] * noise_flat,
                          c2["noise_w"][0, 0] * noise_flat], axis=1)     # (B, 2, HW)

    # NCHW with HW flattened == channel-major, lane-dense; pure reshape.
    x_flat = x_nchw.reshape(B, cin, HW)

    def bcast(shape):                                 # replicated (non-batched) operand
        return pl.BlockSpec(shape, lambda b: (0,) * len(shape))

    out = pl.pallas_call(
        functools.partial(_styled_res_block_kernel, H=H, W=W),
        out_shape=jax.ShapeDtypeStruct((B, cout, HW), jnp.float32),
        grid_spec=pltpu.PrefetchScalarGridSpec(
            num_scalar_prefetch=0,
            grid=(B,),                                # one sample per grid step
            in_specs=[
                pl.BlockSpec((1, cin, HW), lambda b: (b, 0, 0)),    # x
                pl.BlockSpec((1, 2, HW), lambda b: (b, 0, 0)),      # pre-scaled noise
                pl.BlockSpec((1, cin, 1), lambda b: (b, 0, 0)),     # s1
                pl.BlockSpec((1, cout, 3), lambda b: (b, 0, 0)),    # [s2|√2·demod1|demod2]
                bcast((9, cout, cin)),                              # conv1 tap weights
                bcast((9, cout, cout)),                             # conv2 tap weights
                bcast((cout, cin)),                                 # skip weight (/√2 folded)
                bcast((cout, 2)),                                   # [√2·bias1|bias2]
            ],
            out_specs=pl.BlockSpec((1, cout, HW), lambda b: (b, 0, 0)),
        ),
        compiler_params=pltpu.CompilerParams(
            dimension_semantics=("parallel",),        # B>=2 -> both v7x TensorCores
            vmem_limit_bytes=32 * 1024 * 1024),
    )(x_flat, nz, s1_col, vec_o,
      c1["w_taps"], c2["w_taps"], sk["w_fold_bf16"], act_b)
    return out.reshape(B, cout, H, W)


# ----------------------------------------------------------------------------
# Parameter construction (mirrors PyTorch __init__ shapes, scales folded in).
# ----------------------------------------------------------------------------
def init_styled_conv_params(key, cin, cout, style_dim, ksize=3):
    k_conv, k_mod, k_nw, k_ab = jax.random.split(key, 4)
    conv_scale = 1.0 / math.sqrt(cin * ksize * ksize)
    lin_scale = 1.0 / math.sqrt(style_dim)
    # ModulatedConv2d.weight ~ randn(1, cout, cin, k, k); fold its scale in.
    w = jax.random.normal(k_conv, (cout, cin, ksize, ksize), jnp.float32) * conv_scale
    # Tap-major (k*k, cout, cin) bf16 weights for the 9 accumulated tap matmuls.
    w_taps = jnp.transpose(w, (2, 3, 0, 1)).reshape(ksize * ksize, cout, cin)
    # Per-(out,in) sum over taps of the squared base weight (for demodulation).
    wsq_t = jnp.sum(w * w, axis=(2, 3))                         # (cout, cin)
    # EqualLinear(style_dim -> cin), bias_init = 1; fold in its 1/sqrt(S) scale.
    mod_w = jax.random.normal(k_mod, (cin, style_dim), jnp.float32) * lin_scale
    mod_b = jnp.ones((cin, 1), jnp.float32)
    # NoiseInjection.weight and FusedLeakyReLU.bias are zero-init in PyTorch;
    # use small random values here so both paths are actually exercised.
    noise_w = 0.3 * jax.random.normal(k_nw, (1, 1), jnp.float32)
    act_b = 0.1 * jax.random.normal(k_ab, (cout, 1), jnp.float32)
    return dict(w=w, w_taps=w_taps.astype(jnp.bfloat16), wsq_t=wsq_t,
                mod_w=mod_w, mod_b=mod_b, noise_w=noise_w, act_b=act_b)


def init_skip_params(key, cin, cout):
    # ConvLayer(cin, cout, 1, bias=False, activate=False) == EqualConv2d 1x1.
    w = jax.random.normal(key, (cout, cin), jnp.float32) / math.sqrt(cin)
    # The final /sqrt(2) residual scale is folded into the bf16 kernel weight.
    return dict(w=w, w_fold_bf16=(w * (1.0 / _SQRT2)).astype(jnp.bfloat16))


# ----------------------------------------------------------------------------
# Pure-JAX f32 reference (independent math path via lax.conv) for sanity check.
# ----------------------------------------------------------------------------
def _ref_styled_conv(x, style, noise, p):
    s = style @ p["mod_w"].T + p["mod_b"][:, 0][None]                      # (B, cin)
    w = p["w"][None] * s[:, None, :, None, None]                           # (B,cout,cin,k,k)
    demod = jax.lax.rsqrt(jnp.sum(w * w, axis=(2, 3, 4), keepdims=True) + _EPS)
    w = w * demod
    conv = jax.vmap(lambda xb, wb: jax.lax.conv_general_dilated(
        xb[None], wb, window_strides=(1, 1), padding=((1, 1), (1, 1)),
        dimension_numbers=("NCHW", "OIHW", "NCHW"),
        precision=jax.lax.Precision.HIGHEST)[0])(x, w)
    out = conv + p["noise_w"][0, 0] * noise
    out = out + p["act_b"][:, 0][None, :, None, None]
    return jnp.where(out >= 0.0, out, _NEG_SLOPE * out) * _SQRT2


def ref_styled_res_block(x, style, noise, params):
    o1 = _ref_styled_conv(x, style, noise, params["conv1"])
    o2 = _ref_styled_conv(o1, style, noise, params["conv2"])
    skip = jnp.einsum("oc,bchw->bohw", params["skip"]["w"], x,
                      precision=jax.lax.Precision.HIGHEST)
    return (o2 + skip) / _SQRT2


if __name__ == "__main__":
    B, C_IN, C_OUT, H, W, STYLE_DIM = 2, 4, 8, 16, 16, 32
    kx, ks, kn, k1, k2, k3 = jax.random.split(jax.random.PRNGKey(0), 6)

    x = jax.random.normal(kx, (B, C_IN, H, W), jnp.float32)       # NCHW like PyTorch
    style = jax.random.normal(ks, (B, STYLE_DIM), jnp.float32)
    noise = jax.random.normal(kn, (B, 1, H, W), jnp.float32)      # shared noise arg

    params = {
        "conv1": init_styled_conv_params(k1, C_IN, C_OUT, STYLE_DIM),
        "conv2": init_styled_conv_params(k2, C_OUT, C_OUT, STYLE_DIM),
        "skip": init_skip_params(k3, C_IN, C_OUT),
    }

    out = jax.block_until_ready(styled_res_block(x, style, noise, params))

    ref = ref_styled_res_block(x, style, noise, params)
    # Kernel uses bf16 MXU operands with f32 accumulation; compare against an
    # f32 HIGHEST-precision reference with a correspondingly relaxed tolerance.
    np.testing.assert_allclose(np.asarray(out), np.asarray(ref),
                               rtol=3e-2, atol=3e-2)
    print("KERNEL_OK")
</pallas_src>

<mosaic_0001>
module attributes {stable_mosaic.version = 11 : i64} {
  func.func @_styled_res_block_kernel(%arg0: i32, %arg1: memref<1x4x256xf32, #tpu.memory_space<vmem>>, %arg2: memref<1x2x256xf32, #tpu.memory_space<vmem>>, %arg3: memref<1x4x1xf32, #tpu.memory_space<vmem>>, %arg4: memref<1x8x3xf32, #tpu.memory_space<vmem>>, %arg5: memref<9x8x4xbf16, #tpu.memory_space<vmem>>, %arg6: memref<9x8x8xbf16, #tpu.memory_space<vmem>>, %arg7: memref<8x4xbf16, #tpu.memory_space<vmem>>, %arg8: memref<8x2xf32, #tpu.memory_space<vmem>>, %arg9: memref<1x8x256xf32, #tpu.memory_space<vmem>>) attributes {dimension_semantics = [#tpu.dimension_semantics<parallel>], iteration_bounds = array<i64: 2>, scalar_prefetch = 0 : i64, scratch_operands = 0 : i64, tpu.core_type = #tpu.core_type<tc>, window_params = [{transform_indices = @transform_0, window_bounds = array<i64: 1, 4, 256>}, {transform_indices = @transform_1, window_bounds = array<i64: 1, 2, 256>}, {transform_indices = @transform_2, window_bounds = array<i64: 1, 4, 1>}, {transform_indices = @transform_3, window_bounds = array<i64: 1, 8, 3>}, {pipeline_mode = #tpu.pipeline_mode<synchronous>, transform_indices = @transform_4, window_bounds = array<i64: 9, 8, 4>}, {pipeline_mode = #tpu.pipeline_mode<synchronous>, transform_indices = @transform_5, window_bounds = array<i64: 9, 8, 8>}, {pipeline_mode = #tpu.pipeline_mode<synchronous>, transform_indices = @transform_6, window_bounds = array<i64: 8, 4>}, {pipeline_mode = #tpu.pipeline_mode<synchronous>, transform_indices = @transform_7, window_bounds = array<i64: 8, 2>}, {transform_indices = @transform_8, window_bounds = array<i64: 1, 8, 256>}]} {
    %c0 = arith.constant 0 : index
    %c0_0 = arith.constant 0 : index
    %c0_1 = arith.constant 0 : index
    %0 = vector.load %arg1[%c0, %c0_0, %c0_1] : memref<1x4x256xf32, #tpu.memory_space<vmem>>, vector<1x4x256xf32>
    %1 = vector.shape_cast %0 : vector<1x4x256xf32> to vector<4x256xf32>
    %c0_2 = arith.constant 0 : index
    %c0_3 = arith.constant 0 : index
    %c0_4 = arith.constant 0 : index
    %2 = vector.load %arg2[%c0_2, %c0_3, %c0_4] : memref<1x2x256xf32, #tpu.memory_space<vmem>>, vector<1x2x256xf32>
    %3 = vector.shape_cast %2 : vector<1x2x256xf32> to vector<2x256xf32>
    %c0_5 = arith.constant 0 : index
    %c0_6 = arith.constant 0 : index
    %c0_7 = arith.constant 0 : index
    %4 = vector.load %arg3[%c0_5, %c0_6, %c0_7] : memref<1x4x1xf32, #tpu.memory_space<vmem>>, vector<1x4x1xf32>
    %5 = vector.shape_cast %4 : vector<1x4x1xf32> to vector<4x1xf32>
    %c0_8 = arith.constant 0 : index
    %c0_9 = arith.constant 0 : index
    %c0_10 = arith.constant 0 : index
    %6 = vector.load %arg4[%c0_8, %c0_9, %c0_10] : memref<1x8x3xf32, #tpu.memory_space<vmem>>, vector<1x8x3xf32>
    %7 = vector.shape_cast %6 : vector<1x8x3xf32> to vector<8x3xf32>
    %c0_11 = arith.constant 0 : index
    %c0_12 = arith.constant 0 : index
    %8 = vector.load %arg8[%c0_11, %c0_12] : memref<8x2xf32, #tpu.memory_space<vmem>>, vector<8x2xf32>
    %9 = vector.extract_strided_slice %7 {offsets = [0, 0], sizes = [8, 1], strides = [1, 1]} : vector<8x3xf32> to vector<8x1xf32>
    %10 = vector.extract_strided_slice %7 {offsets = [0, 1], sizes = [8, 1], strides = [1, 1]} : vector<8x3xf32> to vector<8x1xf32>
    %11 = vector.extract_strided_slice %7 {offsets = [0, 2], sizes = [8, 1], strides = [1, 1]} : vector<8x3xf32> to vector<8x1xf32>
    %12 = vector.extract_strided_slice %8 {offsets = [0, 0], sizes = [8, 1], strides = [1, 1]} : vector<8x2xf32> to vector<8x1xf32>
    %13 = vector.extract_strided_slice %8 {offsets = [0, 1], sizes = [8, 1], strides = [1, 1]} : vector<8x2xf32> to vector<8x1xf32>
    %14 = vector.extract_strided_slice %3 {offsets = [0, 0], sizes = [1, 256], strides = [1, 1]} : vector<2x256xf32> to vector<1x256xf32>
    %15 = vector.extract_strided_slice %3 {offsets = [1, 0], sizes = [1, 256], strides = [1, 1]} : vector<2x256xf32> to vector<1x256xf32>
    %16 = tpu.iota {dimensions = array<i32: 1>} : vector<1x256xi32>
    %c15_i32 = arith.constant 15 : i32
    %17 = vector.broadcast %c15_i32 : i32 to vector<1x256xi32>
    %18 = arith.andi %16, %17 : vector<1x256xi32>
    %c16_i32 = arith.constant 16 : i32
    %19 = vector.broadcast %c16_i32 : i32 to vector<1x256xi32>
    %20 = arith.cmpi sge, %16, %19 : vector<1x256xi32>
    %c240_i32 = arith.constant 240 : i32
    %21 = vector.broadcast %c240_i32 : i32 to vector<1x256xi32>
    %22 = arith.cmpi slt, %16, %21 : vector<1x256xi32>
    %c1_i32 = arith.constant 1 : i32
    %23 = vector.broadcast %c1_i32 : i32 to vector<1x256xi32>
    %24 = arith.cmpi sge, %18, %23 : vector<1x256xi32>
    %c15_i32_13 = arith.constant 15 : i32
    %25 = vector.broadcast %c15_i32_13 : i32 to vector<1x256xi32>
    %26 = arith.cmpi slt, %18, %25 : vector<1x256xi32>
    %27 = arith.andi %20, %24 : vector<1x256xi1>
    %28 = arith.andi %20, %26 : vector<1x256xi1>
    %29 = arith.andi %22, %24 : vector<1x256xi1>
    %30 = arith.andi %22, %26 : vector<1x256xi1>
    %31 = vector.broadcast %5 : vector<4x1xf32> to vector<4x256xf32>
    %32 = arith.mulf %1, %31 : vector<4x256xf32>
    %c17_i32 = arith.constant 17 : i32
    %33 = tpu.dynamic_rotate %32 by %c17_i32 dim 1 : vector<4x256xf32>, i32 -> vector<4x256xf32>
    %cst = arith.constant 0.000000e+00 : f32
    %34 = vector.shape_cast %27 : vector<1x256xi1> to vector<1x256xi1>
    %35 = vector.broadcast %34 : vector<1x256xi1> to vector<4x256xi1>
    %36 = vector.broadcast %cst : f32 to vector<4x256xf32>
    %37 = arith.select %35, %33, %36 : vector<4x256xi1>, vector<4x256xf32>
    %c0_14 = arith.constant 0 : index
    %c0_15 = arith.constant 0 : index
    %c0_16 = arith.constant 0 : index
    %38 = vector.load %arg5[%c0_14, %c0_15, %c0_16] : memref<9x8x4xbf16, #tpu.memory_space<vmem>>, vector<1x8x4xbf16>
    %39 = vector.shape_cast %38 : vector<1x8x4xbf16> to vector<8x4xbf16>
    %40 = arith.truncf %37 : vector<4x256xf32> to vector<4x256xbf16>
    %cst_17 = arith.constant dense<0.000000e+00> : vector<8x256xf32>
    %41 = tpu.matmul %39, %40, %cst_17 {dimension_numbers = #tpu.dot_dimension_numbers<[1], [0], [0], [1], [0, 0, 1, 1], [], []>} : vector<8x4xbf16>, vector<4x256xbf16>, vector<8x256xf32> -> vector<8x256xf32>
    %c16_i32_18 = arith.constant 16 : i32
    %42 = tpu.dynamic_rotate %32 by %c16_i32_18 dim 1 : vector<4x256xf32>, i32 -> vector<4x256xf32>
    %cst_19 = arith.constant 0.000000e+00 : f32
    %43 = vector.shape_cast %20 : vector<1x256xi1> to vector<1x256xi1>
    %44 = vector.broadcast %43 : vector<1x256xi1> to vector<4x256xi1>
    %45 = vector.broadcast %cst_19 : f32 to vector<4x256xf32>
    %46 = arith.select %44, %42, %45 : vector<4x256xi1>, vector<4x256xf32>
    %c1 = arith.constant 1 : index
    %c0_20 = arith.constant 0 : index
    %c0_21 = arith.constant 0 : index
    %47 = vector.load %arg5[%c1, %c0_20, %c0_21] : memref<9x8x4xbf16, #tpu.memory_space<vmem>>, vector<1x8x4xbf16>
    %48 = vector.shape_cast %47 : vector<1x8x4xbf16> to vector<8x4xbf16>
    %49 = arith.truncf %46 : vector<4x256xf32> to vector<4x256xbf16>
    %cst_22 = arith.constant dense<0.000000e+00> : vector<8x256xf32>
    %50 = tpu.matmul %48, %49, %cst_22 {dimension_numbers = #tpu.dot_dimension_numbers<[1], [0], [0], [1], [0, 0, 1, 1], [], []>} : vector<8x4xbf16>, vector<4x256xbf16>, vector<8x256xf32> -> vector<8x256xf32>
    %51 = arith.addf %41, %50 : vector<8x256xf32>
    %c15_i32_23 = arith.constant 15 : i32
    %52 = tpu.dynamic_rotate %32 by %c15_i32_23 dim 1 : vector<4x256xf32>, i32 -> vector<4x256xf32>
    %cst_24 = arith.constant 0.000000e+00 : f32
    %53 = vector.shape_cast %28 : vector<1x256xi1> to vector<1x256xi1>
    %54 = vector.broadcast %53 : vector<1x256xi1> to vector<4x256xi1>
    %55 = vector.broadcast %cst_24 : f32 to vector<4x256xf32>
    %56 = arith.select %54, %52, %55 : vector<4x256xi1>, vector<4x256xf32>
    %c2 = arith.constant 2 : index
    %c0_25 = arith.constant 0 : index
    %c0_26 = arith.constant 0 : index
    %57 = vector.load %arg5[%c2, %c0_25, %c0_26] : memref<9x8x4xbf16, #tpu.memory_space<vmem>>, vector<1x8x4xbf16>
    %58 = vector.shape_cast %57 : vector<1x8x4xbf16> to vector<8x4xbf16>
    %59 = arith.truncf %56 : vector<4x256xf32> to vector<4x256xbf16>
    %cst_27 = arith.constant dense<0.000000e+00> : vector<8x256xf32>
    %60 = tpu.matmul %58, %59, %cst_27 {dimension_numbers = #tpu.dot_dimension_numbers<[1], [0], [0], [1], [0, 0, 1, 1], [], []>} : vector<8x4xbf16>, vector<4x256xbf16>, vector<8x256xf32> -> vector<8x256xf32>
    %61 = arith.addf %51, %60 : vector<8x256xf32>
    %c1_i32_28 = arith.constant 1 : i32
    %62 = tpu.dynamic_rotate %32 by %c1_i32_28 dim 1 : vector<4x256xf32>, i32 -> vector<4x256xf32>
    %cst_29 = arith.constant 0.000000e+00 : f32
    %63 = vector.shape_cast %24 : vector<1x256xi1> to vector<1x256xi1>
    %64 = vector.broadcast %63 : vector<1x256xi1> to vector<4x256xi1>
    %65 = vector.broadcast %cst_29 : f32 to vector<4x256xf32>
    %66 = arith.select %64, %62, %65 : vector<4x256xi1>, vector<4x256xf32>
    %c3 = arith.constant 3 : index
    %c0_30 = arith.constant 0 : index
    %c0_31 = arith.constant 0 : index
    %67 = vector.load %arg5[%c3, %c0_30, %c0_31] : memref<9x8x4xbf16, #tpu.memory_space<vmem>>, vector<1x8x4xbf16>
    %68 = vector.shape_cast %67 : vector<1x8x4xbf16> to vector<8x4xbf16>
    %69 = arith.truncf %66 : vector<4x256xf32> to vector<4x256xbf16>
    %cst_32 = arith.constant dense<0.000000e+00> : vector<8x256xf32>
    %70 = tpu.matmul %68, %69, %cst_32 {dimension_numbers = #tpu.dot_dimension_numbers<[1], [0], [0], [1], [0, 0, 1, 1], [], []>} : vector<8x4xbf16>, vector<4x256xbf16>, vector<8x256xf32> -> vector<8x256xf32>
    %71 = arith.addf %61, %70 : vector<8x256xf32>
    %c4 = arith.constant 4 : index
    %c0_33 = arith.constant 0 : index
    %c0_34 = arith.constant 0 : index
    %72 = vector.load %arg5[%c4, %c0_33, %c0_34] : memref<9x8x4xbf16, #tpu.memory_space<vmem>>, vector<1x8x4xbf16>
    %73 = vector.shape_cast %72 : vector<1x8x4xbf16> to vector<8x4xbf16>
    %74 = arith.truncf %32 : vector<4x256xf32> to vector<4x256xbf16>
    %cst_35 = arith.constant dense<0.000000e+00> : vector<8x256xf32>
    %75 = tpu.matmul %73, %74, %cst_35 {dimension_numbers = #tpu.dot_dimension_numbers<[1], [0], [0], [1], [0, 0, 1, 1], [], []>} : vector<8x4xbf16>, vector<4x256xbf16>, vector<8x256xf32> -> vector<8x256xf32>
    %76 = arith.addf %71, %75 : vector<8x256xf32>
    %c255_i32 = arith.constant 255 : i32
    %77 = tpu.dynamic_rotate %32 by %c255_i32 dim 1 : vector<4x256xf32>, i32 -> vector<4x256xf32>
    %cst_36 = arith.constant 0.000000e+00 : f32
    %78 = vector.shape_cast %26 : vector<1x256xi1> to vector<1x256xi1>
    %79 = vector.broadcast %78 : vector<1x256xi1> to vector<4x256xi1>
    %80 = vector.broadcast %cst_36 : f32 to vector<4x256xf32>
    %81 = arith.select %79, %77, %80 : vector<4x256xi1>, vector<4x256xf32>
    %c5 = arith.constant 5 : index
    %c0_37 = arith.constant 0 : index
    %c0_38 = arith.constant 0 : index
    %82 = vector.load %arg5[%c5, %c0_37, %c0_38] : memref<9x8x4xbf16, #tpu.memory_space<vmem>>, vector<1x8x4xbf16>
    %83 = vector.shape_cast %82 : vector<1x8x4xbf16> to vector<8x4xbf16>
    %84 = arith.truncf %81 : vector<4x256xf32> to vector<4x256xbf16>
    %cst_39 = arith.constant dense<0.000000e+00> : vector<8x256xf32>
    %85 = tpu.matmul %83, %84, %cst_39 {dimension_numbers = #tpu.dot_dimension_numbers<[1], [0], [0], [1], [0, 0, 1, 1], [], []>} : vector<8x4xbf16>, vector<4x256xbf16>, vector<8x256xf32> -> vector<8x256xf32>
    %86 = arith.addf %76, %85 : vector<8x256xf32>
    %c241_i32 = arith.constant 241 : i32
    %87 = tpu.dynamic_rotate %32 by %c241_i32 dim 1 : vector<4x256xf32>, i32 -> vector<4x256xf32>
    %cst_40 = arith.constant 0.000000e+00 : f32
    %88 = vector.shape_cast %29 : vector<1x256xi1> to vector<1x256xi1>
    %89 = vector.broadcast %88 : vector<1x256xi1> to vector<4x256xi1>
    %90 = vector.broadcast %cst_40 : f32 to vector<4x256xf32>
    %91 = arith.select %89, %87, %90 : vector<4x256xi1>, vector<4x256xf32>
    %c6 = arith.constant 6 : index
    %c0_41 = arith.constant 0 : index
    %c0_42 = arith.constant 0 : index
    %92 = vector.load %arg5[%c6, %c0_41, %c0_42] : memref<9x8x4xbf16, #tpu.memory_space<vmem>>, vector<1x8x4xbf16>
    %93 = vector.shape_cast %92 : vector<1x8x4xbf16> to vector<8x4xbf16>
    %94 = arith.truncf %91 : vector<4x256xf32> to vector<4x256xbf16>
    %cst_43 = arith.constant dense<0.000000e+00> : vector<8x256xf32>
    %95 = tpu.matmul %93, %94, %cst_43 {dimension_numbers = #tpu.dot_dimension_numbers<[1], [0], [0], [1], [0, 0, 1, 1], [], []>} : vector<8x4xbf16>, vector<4x256xbf16>, vector<8x256xf32> -> vector<8x256xf32>
    %96 = arith.addf %86, %95 : vector<8x256xf32>
    %c240_i32_44 = arith.constant 240 : i32
    %97 = tpu.dynamic_rotate %32 by %c240_i32_44 dim 1 : vector<4x256xf32>, i32 -> vector<4x256xf32>
    %cst_45 = arith.constant 0.000000e+00 : f32
    %98 = vector.shape_cast %22 : vector<1x256xi1> to vector<1x256xi1>
    %99 = vector.broadcast %98 : vector<1x256xi1> to vector<4x256xi1>
    %100 = vector.broadcast %cst_45 : f32 to vector<4x256xf32>
    %101 = arith.select %99, %97, %100 : vector<4x256xi1>, vector<4x256xf32>
    %c7 = arith.constant 7 : index
    %c0_46 = arith.constant 0 : index
    %c0_47 = arith.constant 0 : index
    %102 = vector.load %arg5[%c7, %c0_46, %c0_47] : memref<9x8x4xbf16, #tpu.memory_space<vmem>>, vector<1x8x4xbf16>
    %103 = vector.shape_cast %102 : vector<1x8x4xbf16> to vector<8x4xbf16>
    %104 = arith.truncf %101 : vector<4x256xf32> to vector<4x256xbf16>
    %cst_48 = arith.constant dense<0.000000e+00> : vector<8x256xf32>
    %105 = tpu.matmul %103, %104, %cst_48 {dimension_numbers = #tpu.dot_dimension_numbers<[1], [0], [0], [1], [0, 0, 1, 1], [], []>} : vector<8x4xbf16>, vector<4x256xbf16>, vector<8x256xf32> -> vector<8x256xf32>
    %106 = arith.addf %96, %105 : vector<8x256xf32>
    %c239_i32 = arith.constant 239 : i32
    %107 = tpu.dynamic_rotate %32 by %c239_i32 dim 1 : vector<4x256xf32>, i32 -> vector<4x256xf32>
    %cst_49 = arith.constant 0.000000e+00 : f32
    %108 = vector.shape_cast %30 : vector<1x256xi1> to vector<1x256xi1>
    %109 = vector.broadcast %108 : vector<1x256xi1> to vector<4x256xi1>
    %110 = vector.broadcast %cst_49 : f32 to vector<4x256xf32>
    %111 = arith.select %109, %107, %110 : vector<4x256xi1>, vector<4x256xf32>
    %c8 = arith.constant 8 : index
    %c0_50 = arith.constant 0 : index
    %c0_51 = arith.constant 0 : index
    %112 = vector.load %arg5[%c8, %c0_50, %c0_51] : memref<9x8x4xbf16, #tpu.memory_space<vmem>>, vector<1x8x4xbf16>
    %113 = vector.shape_cast %112 : vector<1x8x4xbf16> to vector<8x4xbf16>
    %114 = arith.truncf %111 : vector<4x256xf32> to vector<4x256xbf16>
    %cst_52 = arith.constant dense<0.000000e+00> : vector<8x256xf32>
    %115 = tpu.matmul %113, %114, %cst_52 {dimension_numbers = #tpu.dot_dimension_numbers<[1], [0], [0], [1], [0, 0, 1, 1], [], []>} : vector<8x4xbf16>, vector<4x256xbf16>, vector<8x256xf32> -> vector<8x256xf32>
    %116 = arith.addf %106, %115 : vector<8x256xf32>
    %117 = vector.broadcast %10 : vector<8x1xf32> to vector<8x256xf32>
    %118 = arith.mulf %116, %117 : vector<8x256xf32>
    %119 = vector.broadcast %14 : vector<1x256xf32> to vector<8x256xf32>
    %120 = arith.addf %118, %119 : vector<8x256xf32>
    %121 = vector.broadcast %12 : vector<8x1xf32> to vector<8x256xf32>
    %122 = arith.addf %120, %121 : vector<8x256xf32>
    %cst_53 = arith.constant 0.000000e+00 : f32
    %123 = vector.broadcast %cst_53 : f32 to vector<8x256xf32>
    %124 = arith.cmpf oge, %122, %123 : vector<8x256xf32>
    %cst_54 = arith.constant 2.000000e-01 : f32
    %125 = vector.broadcast %cst_54 : f32 to vector<8x256xf32>
    %126 = arith.mulf %125, %122 : vector<8x256xf32>
    %127 = arith.select %124, %122, %126 : vector<8x256xi1>, vector<8x256xf32>
    %128 = vector.broadcast %9 : vector<8x1xf32> to vector<8x256xf32>
    %129 = arith.mulf %127, %128 : vector<8x256xf32>
    %c17_i32_55 = arith.constant 17 : i32
    %130 = tpu.dynamic_rotate %129 by %c17_i32_55 dim 1 : vector<8x256xf32>, i32 -> vector<8x256xf32>
    %cst_56 = arith.constant 0.000000e+00 : f32
    %131 = vector.shape_cast %27 : vector<1x256xi1> to vector<1x256xi1>
    %132 = vector.broadcast %131 : vector<1x256xi1> to vector<8x256xi1>
    %133 = vector.broadcast %cst_56 : f32 to vector<8x256xf32>
    %134 = arith.select %132, %130, %133 : vector<8x256xi1>, vector<8x256xf32>
    %c0_57 = arith.constant 0 : index
    %c0_58 = arith.constant 0 : index
    %c0_59 = arith.constant 0 : index
    %135 = vector.load %arg6[%c0_57, %c0_58, %c0_59] : memref<9x8x8xbf16, #tpu.memory_space<vmem>>, vector<1x8x8xbf16>
    %136 = vector.shape_cast %135 : vector<1x8x8xbf16> to vector<8x8xbf16>
    %137 = arith.truncf %134 : vector<8x256xf32> to vector<8x256xbf16>
    %cst_60 = arith.constant dense<0.000000e+00> : vector<8x256xf32>
    %138 = tpu.matmul %136, %137, %cst_60 {dimension_numbers = #tpu.dot_dimension_numbers<[1], [0], [0], [1], [0, 0, 1, 1], [], []>} : vector<8x8xbf16>, vector<8x256xbf16>, vector<8x256xf32> -> vector<8x256xf32>
    %c16_i32_61 = arith.constant 16 : i32
    %139 = tpu.dynamic_rotate %129 by %c16_i32_61 dim 1 : vector<8x256xf32>, i32 -> vector<8x256xf32>
    %cst_62 = arith.constant 0.000000e+00 : f32
    %140 = vector.shape_cast %20 : vector<1x256xi1> to vector<1x256xi1>
    %141 = vector.broadcast %140 : vector<1x256xi1> to vector<8x256xi1>
    %142 = vector.broadcast %cst_62 : f32 to vector<8x256xf32>
    %143 = arith.select %141, %139, %142 : vector<8x256xi1>, vector<8x256xf32>
    %c1_63 = arith.constant 1 : index
    %c0_64 = arith.constant 0 : index
    %c0_65 = arith.constant 0 : index
    %144 = vector.load %arg6[%c1_63, %c0_64, %c0_65] : memref<9x8x8xbf16, #tpu.memory_space<vmem>>, vector<1x8x8xbf16>
    %145 = vector.shape_cast %144 : vector<1x8x8xbf16> to vector<8x8xbf16>
    %146 = arith.truncf %143 : vector<8x256xf32> to vector<8x256xbf16>
    %cst_66 = arith.constant dense<0.000000e+00> : vector<8x256xf32>
    %147 = tpu.matmul %145, %146, %cst_66 {dimension_numbers = #tpu.dot_dimension_numbers<[1], [0], [0], [1], [0, 0, 1, 1], [], []>} : vector<8x8xbf16>, vector<8x256xbf16>, vector<8x256xf32> -> vector<8x256xf32>
    %148 = arith.addf %138, %147 : vector<8x256xf32>
    %c15_i32_67 = arith.constant 15 : i32
    %149 = tpu.dynamic_rotate %129 by %c15_i32_67 dim 1 : vector<8x256xf32>, i32 -> vector<8x256xf32>
    %cst_68 = arith.constant 0.000000e+00 : f32
    %150 = vector.shape_cast %28 : vector<1x256xi1> to vector<1x256xi1>
    %151 = vector.broadcast %150 : vector<1x256xi1> to vector<8x256xi1>
    %152 = vector.broadcast %cst_68 : f32 to vector<8x256xf32>
    %153 = arith.select %151, %149, %152 : vector<8x256xi1>, vector<8x256xf32>
    %c2_69 = arith.constant 2 : index
    %c0_70 = arith.constant 0 : index
    %c0_71 = arith.constant 0 : index
    %154 = vector.load %arg6[%c2_69, %c0_70, %c0_71] : memref<9x8x8xbf16, #tpu.memory_space<vmem>>, vector<1x8x8xbf16>
    %155 = vector.shape_cast %154 : vector<1x8x8xbf16> to vector<8x8xbf16>
    %156 = arith.truncf %153 : vector<8x256xf32> to vector<8x256xbf16>
    %cst_72 = arith.constant dense<0.000000e+00> : vector<8x256xf32>
    %157 = tpu.matmul %155, %156, %cst_72 {dimension_numbers = #tpu.dot_dimension_numbers<[1], [0], [0], [1], [0, 0, 1, 1], [], []>} : vector<8x8xbf16>, vector<8x256xbf16>, vector<8x256xf32> -> vector<8x256xf32>
    %158 = arith.addf %148, %157 : vector<8x256xf32>
    %c1_i32_73 = arith.constant 1 : i32
    %159 = tpu.dynamic_rotate %129 by %c1_i32_73 dim 1 : vector<8x256xf32>, i32 -> vector<8x256xf32>
    %cst_74 = arith.constant 0.000000e+00 : f32
    %160 = vector.shape_cast %24 : vector<1x256xi1> to vector<1x256xi1>
    %161 = vector.broadcast %160 : vector<1x256xi1> to vector<8x256xi1>
    %162 = vector.broadcast %cst_74 : f32 to vector<8x256xf32>
    %163 = arith.select %161, %159, %162 : vector<8x256xi1>, vector<8x256xf32>
    %c3_75 = arith.constant 3 : index
    %c0_76 = arith.constant 0 : index
    %c0_77 = arith.constant 0 : index
    %164 = vector.load %arg6[%c3_75, %c0_76, %c0_77] : memref<9x8x8xbf16, #tpu.memory_space<vmem>>, vector<1x8x8xbf16>
    %165 = vector.shape_cast %164 : vector<1x8x8xbf16> to vector<8x8xbf16>
    %166 = arith.truncf %163 : vector<8x256xf32> to vector<8x256xbf16>
    %cst_78 = arith.constant dense<0.000000e+00> : vector<8x256xf32>
    %167 = tpu.matmul %165, %166, %cst_78 {dimension_numbers = #tpu.dot_dimension_numbers<[1], [0], [0], [1], [0, 0, 1, 1], [], []>} : vector<8x8xbf16>, vector<8x256xbf16>, vector<8x256xf32> -> vector<8x256xf32>
    %168 = arith.addf %158, %167 : vector<8x256xf32>
    %c4_79 = arith.constant 4 : index
    %c0_80 = arith.constant 0 : index
    %c0_81 = arith.constant 0 : index
    %169 = vector.load %arg6[%c4_79, %c0_80, %c0_81] : memref<9x8x8xbf16, #tpu.memory_space<vmem>>, vector<1x8x8xbf16>
    %170 = vector.shape_cast %169 : vector<1x8x8xbf16> to vector<8x8xbf16>
    %171 = arith.truncf %129 : vector<8x256xf32> to vector<8x256xbf16>
    %cst_82 = arith.constant dense<0.000000e+00> : vector<8x256xf32>
    %172 = tpu.matmul %170, %171, %cst_82 {dimension_numbers = #tpu.dot_dimension_numbers<[1], [0], [0], [1], [0, 0, 1, 1], [], []>} : vector<8x8xbf16>, vector<8x256xbf16>, vector<8x256xf32> -> vector<8x256xf32>
    %173 = arith.addf %168, %172 : vector<8x256xf32>
    %c255_i32_83 = arith.constant 255 : i32
    %174 = tpu.dynamic_rotate %129 by %c255_i32_83 dim 1 : vector<8x256xf32>, i32 -> vector<8x256xf32>
    %cst_84 = arith.constant 0.000000e+00 : f32
    %175 = vector.shape_cast %26 : vector<1x256xi1> to vector<1x256xi1>
    %176 = vector.broadcast %175 : vector<1x256xi1> to vector<8x256xi1>
    %177 = vector.broadcast %cst_84 : f32 to vector<8x256xf32>
    %178 = arith.select %176, %174, %177 : vector<8x256xi1>, vector<8x256xf32>
    %c5_85 = arith.constant 5 : index
    %c0_86 = arith.constant 0 : index
    %c0_87 = arith.constant 0 : index
    %179 = vector.load %arg6[%c5_85, %c0_86, %c0_87] : memref<9x8x8xbf16, #tpu.memory_space<vmem>>, vector<1x8x8xbf16>
    %180 = vector.shape_cast %179 : vector<1x8x8xbf16> to vector<8x8xbf16>
    %181 = arith.truncf %178 : vector<8x256xf32> to vector<8x256xbf16>
    %cst_88 = arith.constant dense<0.000000e+00> : vector<8x256xf32>
    %182 = tpu.matmul %180, %181, %cst_88 {dimension_numbers = #tpu.dot_dimension_numbers<[1], [0], [0], [1], [0, 0, 1, 1], [], []>} : vector<8x8xbf16>, vector<8x256xbf16>, vector<8x256xf32> -> vector<8x256xf32>
    %183 = arith.addf %173, %182 : vector<8x256xf32>
    %c241_i32_89 = arith.constant 241 : i32
    %184 = tpu.dynamic_rotate %129 by %c241_i32_89 dim 1 : vector<8x256xf32>, i32 -> vector<8x256xf32>
    %cst_90 = arith.constant 0.000000e+00 : f32
    %185 = vector.shape_cast %29 : vector<1x256xi1> to vector<1x256xi1>
    %186 = vector.broadcast %185 : vector<1x256xi1> to vector<8x256xi1>
    %187 = vector.broadcast %cst_90 : f32 to vector<8x256xf32>
    %188 = arith.select %186, %184, %187 : vector<8x256xi1>, vector<8x256xf32>
    %c6_91 = arith.constant 6 : index
    %c0_92 = arith.constant 0 : index
    %c0_93 = arith.constant 0 : index
    %189 = vector.load %arg6[%c6_91, %c0_92, %c0_93] : memref<9x8x8xbf16, #tpu.memory_space<vmem>>, vector<1x8x8xbf16>
    %190 = vector.shape_cast %189 : vector<1x8x8xbf16> to vector<8x8xbf16>
    %191 = arith.truncf %188 : vector<8x256xf32> to vector<8x256xbf16>
    %cst_94 = arith.constant dense<0.000000e+00> : vector<8x256xf32>
    %192 = tpu.matmul %190, %191, %cst_94 {dimension_numbers = #tpu.dot_dimension_numbers<[1], [0], [0], [1], [0, 0, 1, 1], [], []>} : vector<8x8xbf16>, vector<8x256xbf16>, vector<8x256xf32> -> vector<8x256xf32>
    %193 = arith.addf %183, %192 : vector<8x256xf32>
    %c240_i32_95 = arith.constant 240 : i32
    %194 = tpu.dynamic_rotate %129 by %c240_i32_95 dim 1 : vector<8x256xf32>, i32 -> vector<8x256xf32>
    %cst_96 = arith.constant 0.000000e+00 : f32
    %195 = vector.shape_cast %22 : vector<1x256xi1> to vector<1x256xi1>
    %196 = vector.broadcast %195 : vector<1x256xi1> to vector<8x256xi1>
    %197 = vector.broadcast %cst_96 : f32 to vector<8x256xf32>
    %198 = arith.select %196, %194, %197 : vector<8x256xi1>, vector<8x256xf32>
    %c7_97 = arith.constant 7 : index
    %c0_98 = arith.constant 0 : index
    %c0_99 = arith.constant 0 : index
    %199 = vector.load %arg6[%c7_97, %c0_98, %c0_99] : memref<9x8x8xbf16, #tpu.memory_space<vmem>>, vector<1x8x8xbf16>
    %200 = vector.shape_cast %199 : vector<1x8x8xbf16> to vector<8x8xbf16>
    %201 = arith.truncf %198 : vector<8x256xf32> to vector<8x256xbf16>
    %cst_100 = arith.constant dense<0.000000e+00> : vector<8x256xf32>
    %202 = tpu.matmul %200, %201, %cst_100 {dimension_numbers = #tpu.dot_dimension_numbers<[1], [0], [0], [1], [0, 0, 1, 1], [], []>} : vector<8x8xbf16>, vector<8x256xbf16>, vector<8x256xf32> -> vector<8x256xf32>
    %203 = arith.addf %193, %202 : vector<8x256xf32>
    %c239_i32_101 = arith.constant 239 : i32
    %204 = tpu.dynamic_rotate %129 by %c239_i32_101 dim 1 : vector<8x256xf32>, i32 -> vector<8x256xf32>
    %cst_102 = arith.constant 0.000000e+00 : f32
    %205 = vector.shape_cast %30 : vector<1x256xi1> to vector<1x256xi1>
    %206 = vector.broadcast %205 : vector<1x256xi1> to vector<8x256xi1>
    %207 = vector.broadcast %cst_102 : f32 to vector<8x256xf32>
    %208 = arith.select %206, %204, %207 : vector<8x256xi1>, vector<8x256xf32>
    %c8_103 = arith.constant 8 : index
    %c0_104 = arith.constant 0 : index
    %c0_105 = arith.constant 0 : index
    %209 = vector.load %arg6[%c8_103, %c0_104, %c0_105] : memref<9x8x8xbf16, #tpu.memory_space<vmem>>, vector<1x8x8xbf16>
    %210 = vector.shape_cast %209 : vector<1x8x8xbf16> to vector<8x8xbf16>
    %211 = arith.truncf %208 : vector<8x256xf32> to vector<8x256xbf16>
    %cst_106 = arith.constant dense<0.000000e+00> : vector<8x256xf32>
    %212 = tpu.matmul %210, %211, %cst_106 {dimension_numbers = #tpu.dot_dimension_numbers<[1], [0], [0], [1], [0, 0, 1, 1], [], []>} : vector<8x8xbf16>, vector<8x256xbf16>, vector<8x256xf32> -> vector<8x256xf32>
    %213 = arith.addf %203, %212 : vector<8x256xf32>
    %214 = vector.broadcast %11 : vector<8x1xf32> to vector<8x256xf32>
    %215 = arith.mulf %213, %214 : vector<8x256xf32>
    %216 = vector.broadcast %15 : vector<1x256xf32> to vector<8x256xf32>
    %217 = arith.addf %215, %216 : vector<8x256xf32>
    %218 = vector.broadcast %13 : vector<8x1xf32> to vector<8x256xf32>
    %219 = arith.addf %217, %218 : vector<8x256xf32>
    %cst_107 = arith.constant 0.000000e+00 : f32
    %220 = vector.broadcast %cst_107 : f32 to vector<8x256xf32>
    %221 = arith.cmpf oge, %219, %220 : vector<8x256xf32>
    %cst_108 = arith.constant 2.000000e-01 : f32
    %222 = vector.broadcast %cst_108 : f32 to vector<8x256xf32>
    %223 = arith.mulf %222, %219 : vector<8x256xf32>
    %224 = arith.select %221, %219, %223 : vector<8x256xi1>, vector<8x256xf32>
    %c0_109 = arith.constant 0 : index
    %c0_110 = arith.constant 0 : index
    %225 = vector.load %arg7[%c0_109, %c0_110] : memref<8x4xbf16, #tpu.memory_space<vmem>>, vector<8x4xbf16>
    %226 = arith.truncf %1 : vector<4x256xf32> to vector<4x256xbf16>
    %cst_111 = arith.constant dense<0.000000e+00> : vector<8x256xf32>
    %227 = tpu.matmul %225, %226, %cst_111 {dimension_numbers = #tpu.dot_dimension_numbers<[1], [0], [0], [1], [0, 0, 1, 1], [], []>} : vector<8x4xbf16>, vector<4x256xbf16>, vector<8x256xf32> -> vector<8x256xf32>
    %228 = arith.addf %224, %227 : vector<8x256xf32>
    %c0_112 = arith.constant 0 : index
    %c0_113 = arith.constant 0 : index
    %c0_114 = arith.constant 0 : index
    %229 = vector.load %arg9[%c0_112, %c0_113, %c0_114] : memref<1x8x256xf32, #tpu.memory_space<vmem>>, vector<1x8x256xf32>
    %230 = vector.shape_cast %229 : vector<1x8x256xf32> to vector<8x256xf32>
    %231 = vector.shape_cast %228 : vector<8x256xf32> to vector<1x8x256xf32>
    tpu.vector_store %arg9[%c0_112, %c0_113, %c0_114], %231 {strides = array<i32>} : memref<1x8x256xf32, #tpu.memory_space<vmem>>, vector<1x8x256xf32>,
    return
  }
  func.func @transform_0(%arg0: i32) -> (i32, i32, i32) {
    %c0_i32 = arith.constant 0 : i32
    %c0_i32_0 = arith.constant 0 : i32
    %c0_i32_1 = arith.constant 0 : i32
    return %arg0, %c0_i32, %c0_i32_0 : i32, i32, i32
  }
  func.func @transform_1(%arg0: i32) -> (i32, i32, i32) {
    %c0_i32 = arith.constant 0 : i32
    %c0_i32_0 = arith.constant 0 : i32
    %c0_i32_1 = arith.constant 0 : i32
    return %arg0, %c0_i32, %c0_i32_0 : i32, i32, i32
  }
  func.func @transform_2(%arg0: i32) -> (i32, i32, i32) {
    %c0_i32 = arith.constant 0 : i32
    %c0_i32_0 = arith.constant 0 : i32
    %c0_i32_1 = arith.constant 0 : i32
    return %arg0, %c0_i32, %c0_i32_0 : i32, i32, i32
  }
  func.func @transform_3(%arg0: i32) -> (i32, i32, i32) {
    %c0_i32 = arith.constant 0 : i32
    %c0_i32_0 = arith.constant 0 : i32
    %c0_i32_1 = arith.constant 0 : i32
    return %arg0, %c0_i32, %c0_i32_0 : i32, i32, i32
  }
  func.func @transform_4(%arg0: i32) -> (i32, i32, i32) {
    %c0_i32 = arith.constant 0 : i32
    %c0_i32_0 = arith.constant 0 : i32
    %c0_i32_1 = arith.constant 0 : i32
    %c0_i32_2 = arith.constant 0 : i32
    return %c0_i32, %c0_i32_0, %c0_i32_1 : i32, i32, i32
  }
  func.func @transform_5(%arg0: i32) -> (i32, i32, i32) {
    %c0_i32 = arith.constant 0 : i32
    %c0_i32_0 = arith.constant 0 : i32
    %c0_i32_1 = arith.constant 0 : i32
    %c0_i32_2 = arith.constant 0 : i32
    return %c0_i32, %c0_i32_0, %c0_i32_1 : i32, i32, i32
  }
  func.func @transform_6(%arg0: i32) -> (i32, i32) {
    %c0_i32 = arith.constant 0 : i32
    %c0_i32_0 = arith.constant 0 : i32
    %c0_i32_1 = arith.constant 0 : i32
    return %c0_i32, %c0_i32_0 : i32, i32
  }
  func.func @transform_7(%arg0: i32) -> (i32, i32) {
    %c0_i32 = arith.constant 0 : i32
    %c0_i32_0 = arith.constant 0 : i32
    %c0_i32_1 = arith.constant 0 : i32
    return %c0_i32, %c0_i32_0 : i32, i32
  }
  func.func @transform_8(%arg0: i32) -> (i32, i32, i32) {
    %c0_i32 = arith.constant 0 : i32
    %c0_i32_0 = arith.constant 0 : i32
    %c0_i32_1 = arith.constant 0 : i32
    return %arg0, %c0_i32, %c0_i32_0 : i32, i32, i32
  }
}

</mosaic_0001>

<llo_original>
// kernel: styled_res_block.1
$region0: #{styled_res_block.1}
  #allocation0 [shape = 'u32[]', space=smem, size = 0x4, offset = 0x4, fixed_abs, tag = 'smem constant byte address 0x4 - core index']
  #allocation1 [shape = 'u32[144,128]{1,0:T(1,128)}', space=vmem, size = 0x12000, scoped, tag = 'internal scratch']
  %s0 = inlined_call_operand.vmem [shape: f32[2,4,256], index: 0, kind: input, shape index: {}]
  %s1 = inlined_call_operand.vmem [shape: f32[2,2,256], index: 1, kind: input, shape index: {}]
  %s2 = inlined_call_operand.vmem [shape: f32[2,4,1], index: 2, kind: input, shape index: {}]
  %s3 = inlined_call_operand.vmem [shape: f32[2,8,3], index: 3, kind: input, shape index: {}]
  %s4 = inlined_call_operand.vmem [shape: bf16[9,8,4], index: 4, kind: input, shape index: {}]
  %s5 = inlined_call_operand.vmem [shape: bf16[9,8,8], index: 5, kind: input, shape index: {}]
  %s6 = inlined_call_operand.vmem [shape: bf16[8,4], index: 6, kind: input, shape index: {}]
  %s7 = inlined_call_operand.vmem [shape: f32[8,2], index: 7, kind: input, shape index: {}]
  %s8 = inlined_call_operand.vmem [shape: f32[2,8,256], index: 8, kind: output, shape index: {}]
  %s9 = sld [smem:[#allocation0]]
  $region65: #{styled_res_block.1} parent=0
    _
  %s11 = ssub.s32 1, %s9
  %s12 = scalar_select 0, %s11, %s9
  loop: start=0, step=1, limit=4
  $region2: #{styled_res_block.1} parent=0 // loop_pre_header
    _
  $region3: #{styled_res_block.1} parent=0 // loop_header
    %s14 = sphi 0, %s18
    %p15 = scmp.ge.s32.totalorder %s14, 4
    %s24 = sphi 0, %s26
    %s27 = sphi 0, %s24
    %s28 = sphi 0, %s27
    %s44 = sphi 0, %s28
    %s50 = sphi 0, %s52
    %s53 = sphi 0, %s50
    %s54 = sphi 0, %s53
    %s70 = sphi 0, %s54
    %s76 = sphi 0, %s78
    %s79 = sphi 0, %s76
    %s80 = sphi 0, %s79
    %s96 = sphi 0, %s80
    %s102 = sphi 0, %s104
    %s105 = sphi 0, %s102
    %s106 = sphi 0, %s105
    %s122 = sphi 0, %s106
    %s126 = sphi 0, %s126
    %s128 = sphi 0, %s126
    %s129 = sphi 0, %s128
    %s143 = sphi 0, %s129
    %s147 = sphi 0, %s147
    %s149 = sphi 0, %s147
    %s150 = sphi 0, %s149
    %s164 = sphi 0, %s150
    %s168 = sphi 0, %s168
    %s170 = sphi 0, %s168
    %s171 = sphi 0, %s170
    %s185 = sphi 0, %s171
    %s189 = sphi 0, %s189
    %s191 = sphi 0, %s189
    %s192 = sphi 0, %s191
    %s206 = sphi 0, %s192
    %s212 = sphi 0, %s214
    %s215 = sphi 0, %s212
    %s216 = sphi 0, %s215
    %s232 = sphi 0, %s216
  $region4: #{styled_res_block.1} parent=0 // loop_header_branch
    %17 = sbr.rel (%p15) target = $region8
  $region5: #{styled_res_block.1} parent=0 // loop_body
    %s19 = ssub.s32 %s14, 1
    %s20 = ssub.s32 %s14, 2
    %s21 = sadd.s32 %s14, 1
    %s22 = ssub.s32 %s14, %s21
    %p23 = scmp.eq.s32.totalorder %s22, 0
    %s25 = sadd.s32 %s24, 1
    %s26 = scalar_select %p23, %s24, %s25
    %p29 = pneg %p23
    %p30 = scmp.eq.s32.totalorder %s14, 1
    %p31 = por %p29, %p30
    %p32 = scmp.ne.s32.totalorder %s24, %s27
    %p33 = scmp.eq.s32.totalorder %s14, 0
    %p34 = por %p32, %p33
    %p35 = scmp.ne.s32.totalorder %s24, %s27
    %p36 = scmp.eq.s32.totalorder %s19, 1
    %p37 = por %p35, %p36
    %p38 = scmp.ne.s32.totalorder %s27, %s28
    %p39 = scmp.eq.s32.totalorder %s19, 0
    %p40 = por %p38, %p39
    %p41 = scmp.ne.s32.totalorder %s27, %s28
    %p42 = scmp.eq.s32.totalorder %s20, 1
    %p43 = por %p41, %p42
    %p45 = scmp.ne.s32.totalorder %s28, %s44
    %p46 = scmp.eq.s32.totalorder %s20, 0
    %p47 = por %p45, %p46
    %s48 = ssub.s32 %s14, %s21
    %p49 = scmp.eq.s32.totalorder %s48, 0
    %s51 = sadd.s32 %s50, 1
    %s52 = scalar_select %p49, %s50, %s51
    %p55 = pneg %p49
    %p56 = scmp.eq.s32.totalorder %s14, 1
    %p57 = por %p55, %p56
    %p58 = scmp.ne.s32.totalorder %s50, %s53
    %p59 = scmp.eq.s32.totalorder %s14, 0
    %p60 = por %p58, %p59
    %p61 = scmp.ne.s32.totalorder %s50, %s53
    %p62 = scmp.eq.s32.totalorder %s19, 1
    %p63 = por %p61, %p62
    %p64 = scmp.ne.s32.totalorder %s53, %s54
    %p65 = scmp.eq.s32.totalorder %s19, 0
    %p66 = por %p64, %p65
    %p67 = scmp.ne.s32.totalorder %s53, %s54
    %p68 = scmp.eq.s32.totalorder %s20, 1
    %p69 = por %p67, %p68
    %p71 = scmp.ne.s32.totalorder %s54, %s70
    %p72 = scmp.eq.s32.totalorder %s20, 0
    %p73 = por %p71, %p72
    %s74 = ssub.s32 %s14, %s21
    %p75 = scmp.eq.s32.totalorder %s74, 0
    %s77 = sadd.s32 %s76, 1
    %s78 = scalar_select %p75, %s76, %s77
    %p81 = pneg %p75
    %p82 = scmp.eq.s32.totalorder %s14, 1
    %p83 = por %p81, %p82
    %p84 = scmp.ne.s32.totalorder %s76, %s79
    %p85 = scmp.eq.s32.totalorder %s14, 0
    %p86 = por %p84, %p85
    %p87 = scmp.ne.s32.totalorder %s76, %s79
    %p88 = scmp.eq.s32.totalorder %s19, 1
    %p89 = por %p87, %p88
    %p90 = scmp.ne.s32.totalorder %s79, %s80
    %p91 = scmp.eq.s32.totalorder %s19, 0
    %p92 = por %p90, %p91
    %p93 = scmp.ne.s32.totalorder %s79, %s80
    %p94 = scmp.eq.s32.totalorder %s20, 1
    %p95 = por %p93, %p94
    %p97 = scmp.ne.s32.totalorder %s80, %s96
    %p98 = scmp.eq.s32.totalorder %s20, 0
    %p99 = por %p97, %p98
    %s100 = ssub.s32 %s14, %s21
    %p101 = scmp.eq.s32.totalorder %s100, 0
    %s103 = sadd.s32 %s102, 1
    %s104 = scalar_select %p101, %s102, %s103
    %p107 = pneg %p101
    %p108 = scmp.eq.s32.totalorder %s14, 1
    %p109 = por %p107, %p108
    %p110 = scmp.ne.s32.totalorder %s102, %s105
    %p111 = scmp.eq.s32.totalorder %s14, 0
    %p112 = por %p110, %p111
    %p113 = scmp.ne.s32.totalorder %s102, %s105
    %p114 = scmp.eq.s32.totalorder %s19, 1
    %p115 = por %p113, %p114
    %p116 = scmp.ne.s32.totalorder %s105, %s106
    %p117 = scmp.eq.s32.totalorder %s19, 0
    %p118 = por %p116, %p117
    %p119 = scmp.ne.s32.totalorder %s105, %s106
    %p120 = scmp.eq.s32.totalorder %s20, 1
    %p121 = por %p119, %p120
    %p123 = scmp.ne.s32.totalorder %s106, %s122
    %p124 = scmp.eq.s32.totalorder %s20, 0
    %p125 = por %p123, %p124
    %s127 = sadd.s32 %s126, 1
    %p130 = scmp.eq.s32.totalorder %s14, 1
    %p131 = scmp.ne.s32.totalorder %s126, %s128
    %p132 = scmp.eq.s32.totalorder %s14, 0
    %p133 = por %p131, %p132
    %p134 = scmp.ne.s32.totalorder %s126, %s128
    %p135 = scmp.eq.s32.totalorder %s19, 1
    %p136 = por %p134, %p135
    %p137 = scmp.ne.s32.totalorder %s128, %s129
    %p138 = scmp.eq.s32.totalorder %s19, 0
    %p139 = por %p137, %p138
    %p140 = scmp.ne.s32.totalorder %s128, %s129
    %p141 = scmp.eq.s32.totalorder %s20, 1
    %p142 = por %p140, %p141
    %p144 = scmp.ne.s32.totalorder %s129, %s143
    %p145 = scmp.eq.s32.totalorder %s20, 0
    %p146 = por %p144, %p145
    %s148 = sadd.s32 %s147, 1
    %p151 = scmp.eq.s32.totalorder %s14, 1
    %p152 = scmp.ne.s32.totalorder %s147, %s149
    %p153 = scmp.eq.s32.totalorder %s14, 0
    %p154 = por %p152, %p153
    %p155 = scmp.ne.s32.totalorder %s147, %s149
    %p156 = scmp.eq.s32.totalorder %s19, 1
    %p157 = por %p155, %p156
    %p158 = scmp.ne.s32.totalorder %s149, %s150
    %p159 = scmp.eq.s32.totalorder %s19, 0
    %p160 = por %p158, %p159
    %p161 = scmp.ne.s32.totalorder %s149, %s150
    %p162 = scmp.eq.s32.totalorder %s20, 1
    %p163 = por %p161, %p162
    %p165 = scmp.ne.s32.totalorder %s150, %s164
    %p166 = scmp.eq.s32.totalorder %s20, 0
    %p167 = por %p165, %p166
    %s169 = sadd.s32 %s168, 1
    %p172 = scmp.eq.s32.totalorder %s14, 1
    %p173 = scmp.ne.s32.totalorder %s168, %s170
    %p174 = scmp.eq.s32.totalorder %s14, 0
    %p175 = por %p173, %p174
    %p176 = scmp.ne.s32.totalorder %s168, %s170
    %p177 = scmp.eq.s32.totalorder %s19, 1
    %p178 = por %p176, %p177
    %p179 = scmp.ne.s32.totalorder %s170, %s171
    %p180 = scmp.eq.s32.totalorder %s19, 0
    %p181 = por %p179, %p180
    %p182 = scmp.ne.s32.totalorder %s170, %s171
    %p183 = scmp.eq.s32.totalorder %s20, 1
    %p184 = por %p182, %p183
    %p186 = scmp.ne.s32.totalorder %s171, %s185
    %p187 = scmp.eq.s32.totalorder %s20, 0
    %p188 = por %p186, %p187
    %s190 = sadd.s32 %s189, 1
    %p193 = scmp.eq.s32.totalorder %s14, 1
    %p194 = scmp.ne.s32.totalorder %s189, %s191
    %p195 = scmp.eq.s32.totalorder %s14, 0
    %p196 = por %p194, %p195
    %p197 = scmp.ne.s32.totalorder %s189, %s191
    %p198 = scmp.eq.s32.totalorder %s19, 1
    %p199 = por %p197, %p198
    %p200 = scmp.ne.s32.totalorder %s191, %s192
    %p201 = scmp.eq.s32.totalorder %s19, 0
    %p202 = por %p200, %p201
    %p203 = scmp.ne.s32.totalorder %s191, %s192
    %p204 = scmp.eq.s32.totalorder %s20, 1
    %p205 = por %p203, %p204
    %p207 = scmp.ne.s32.totalorder %s192, %s206
    %p208 = scmp.eq.s32.totalorder %s20, 0
    %p209 = por %p207, %p208
    %s210 = ssub.s32 %s14, %s21
    %p211 = scmp.eq.s32.totalorder %s210, 0
    %s213 = sadd.s32 %s212, 1
    %s214 = scalar_select %p211, %s212, %s213
    %p217 = pneg %p211
    %p218 = scmp.eq.s32.totalorder %s14, 1
    %p219 = por %p217, %p218
    %p220 = scmp.ne.s32.totalorder %s212, %s215
    %p221 = scmp.eq.s32.totalorder %s14, 0
    %p222 = por %p220, %p221
    %p223 = scmp.ne.s32.totalorder %s212, %s215
    %p224 = scmp.eq.s32.totalorder %s19, 1
    %p225 = por %p223, %p224
    %p226 = scmp.ne.s32.totalorder %s215, %s216
    %p227 = scmp.eq.s32.totalorder %s19, 0
    %p228 = por %p226, %p227
    %p229 = scmp.ne.s32.totalorder %s215, %s216
    %p230 = scmp.eq.s32.totalorder %s20, 1
    %p231 = por %p229, %p230
    %p233 = scmp.ne.s32.totalorder %s216, %s232
    %p234 = scmp.eq.s32.totalorder %s20, 0
    %p235 = por %p233, %p234
    %p236 = scmp.le.s32.totalorder 1, %s14
    %p237 = scmp.lt.s32.totalorder %s14, 3
    %p238 = pnand %p236, %p237
    %p239 = pneg %p238
    // Predicated region
    $region9: #{styled_res_block.1} parent=5 // pred_check
      _
    $region10: #{styled_res_block.1} parent=5 // pred_check_branch
      %241 = sbr.rel (%p238) target = $region12
    $region11: #{styled_res_block.1} parent=5 // pred_region
      %s242 = ssub.s32 %s14, 1
      // Predicated region
      $region13: #{styled_res_block.1} parent=11 // pred_check
        %p243 = pneg %p139
      $region14: #{styled_res_block.1} parent=11 // pred_check_branch
        %245 = sbr.rel (%p243) target = $region16
      $region15: #{styled_res_block.1} parent=11 // pred_region
        _
      $region16: #{styled_res_block.1} parent=11 // pred_fallthru
        _
      // Predicated region
      $region17: #{styled_res_block.1} parent=11 // pred_check
        %p246 = pneg %p160
      $region18: #{styled_res_block.1} parent=11 // pred_check_branch
        %248 = sbr.rel (%p246) target = $region20
      $region19: #{styled_res_block.1} parent=11 // pred_region
        _
      $region20: #{styled_res_block.1} parent=11 // pred_fallthru
        _
      // Predicated region
      $region21: #{styled_res_block.1} parent=11 // pred_check
        %p249 = pneg %p181
      $region22: #{styled_res_block.1} parent=11 // pred_check_branch
        %251 = sbr.rel (%p249) target = $region24
      $region23: #{styled_res_block.1} parent=11 // pred_region
        _
      $region24: #{styled_res_block.1} parent=11 // pred_fallthru
        _
      // Predicated region
      $region25: #{styled_res_block.1} parent=11 // pred_check
        %p252 = pneg %p202
      $region26: #{styled_res_block.1} parent=11 // pred_check_branch
        %254 = sbr.rel (%p252) target = $region28
      $region27: #{styled_res_block.1} parent=11 // pred_region
        _
      $region28: #{styled_res_block.1} parent=11 // pred_fallthru
        _
    $region12: #{styled_res_block.1} parent=5 // pred_fallthru
      _
    %p255 = scmp.lt.s32.totalorder %s14, 2
    // Predicated region
    $region29: #{styled_res_block.1} parent=5 // pred_check
      %p256 = pneg %p255
    $region30: #{styled_res_block.1} parent=5 // pred_check_branch
      %258 = sbr.rel (%p256) target = $region32
    $region31: #{styled_res_block.1} parent=5 // pred_region
      // Predicated region
      $region33: #{styled_res_block.1} parent=31 // pred_check
        %p259 = pneg %p34
      $region34: #{styled_res_block.1} parent=31 // pred_check_branch
        %261 = sbr.rel (%p259) target = $region36
      $region35: #{styled_res_block.1} parent=31 // pred_region
        %p262 = scmp.lt.s32.totalorder %s14, 1
        %s263 = scalar_select %p262, %s14, 1
        %s264 = smul.addr %s263, 2
        %s265 = smul.addr %s264, 4
        %s266 = scalar_lea.vmem %s0, %s265
      $region36: #{styled_res_block.1} parent=31 // pred_fallthru
        _
      // Predicated region
      $region37: #{styled_res_block.1} parent=31 // pred_check
        %p267 = pneg %p60
      $region38: #{styled_res_block.1} parent=31 // pred_check_branch
        %269 = sbr.rel (%p267) target = $region40
      $region39: #{styled_res_block.1} parent=31 // pred_region
        %p270 = scmp.lt.s32.totalorder %s14, 1
        %s271 = scalar_select %p270, %s14, 1
        %s272 = smul.addr %s271, 2
        %s273 = smul.addr %s272, 2
        %s274 = scalar_lea.vmem %s1, %s273
      $region40: #{styled_res_block.1} parent=31 // pred_fallthru
        _
      // Predicated region
      $region41: #{styled_res_block.1} parent=31 // pred_check
        %p275 = pneg %p86
      $region42: #{styled_res_block.1} parent=31 // pred_check_branch
        %277 = sbr.rel (%p275) target = $region44
      $region43: #{styled_res_block.1} parent=31 // pred_region
        %p278 = scmp.lt.s32.totalorder %s14, 1
        %s279 = scalar_select %p278, %s14, 1
        %s280 = smul.addr %s279, 4
        %s281 = scalar_lea.vmem %s2, %s280
      $region44: #{styled_res_block.1} parent=31 // pred_fallthru
        _
      // Predicated region
      $region45: #{styled_res_block.1} parent=31 // pred_check
        %p282 = pneg %p112
      $region46: #{styled_res_block.1} parent=31 // pred_check_branch
        %284 = sbr.rel (%p282) target = $region48
      $region47: #{styled_res_block.1} parent=31 // pred_region
        %p285 = scmp.lt.s32.totalorder %s14, 1
        %s286 = scalar_select %p285, %s14, 1
        %s287 = smul.addr %s286, 8
        %s288 = scalar_lea.vmem %s3, %s287
      $region48: #{styled_res_block.1} parent=31 // pred_fallthru
        _
    $region32: #{styled_res_block.1} parent=5 // pred_fallthru
      _
    %p289 = scmp.le.s32.totalorder 1, %s14
    %p290 = scmp.lt.s32.totalorder %s14, 3
    %p291 = pnand %p289, %p290
    %p292 = pneg %p291
    // Predicated region
    $region49: #{styled_res_block.1} parent=5 // pred_check
      _
    $region50: #{styled_res_block.1} parent=5 // pred_check_branch
      %294 = sbr.rel (%p291) target = $region52
    $region51: #{styled_res_block.1} parent=5 // pred_region
      %s295 = ssub.s32 %s14, 1
      %p296 = scmp.lt.s32.totalorder %s19, 1
      %s297 = scalar_select %p296, %s19, 1
      %s298 = smul.addr %s297, 2
      %s299 = smul.addr %s298, 4
      %s300 = scalar_lea.vmem %s0, %s299
      %p301 = pneg %p40
      %p302 = pneg %p37
      %p303 = scmp.lt.s32.totalorder %s19, 1
      %s304 = scalar_select %p303, %s19, 1
      %s305 = smul.addr %s304, 2
      %s306 = smul.addr %s305, 2
      %s307 = scalar_lea.vmem %s1, %s306
      %p308 = pneg %p66
      %p309 = pneg %p63
      %p310 = scmp.lt.s32.totalorder %s19, 1
      %s311 = scalar_select %p310, %s19, 1
      %s312 = smul.addr %s311, 4
      %s313 = scalar_lea.vmem %s2, %s312
      %p314 = pneg %p92
      %p315 = pneg %p89
      %p316 = scmp.lt.s32.totalorder %s19, 1
      %s317 = scalar_select %p316, %s19, 1
      %s318 = smul.addr %s317, 8
      %s319 = scalar_lea.vmem %s3, %s318
      %p320 = pneg %p118
      %p321 = pneg %p115
      %p322 = pneg %p139
      %p323 = pneg %p136
      %p324 = pneg %p160
      %p325 = pneg %p157
      %p326 = pneg %p181
      %p327 = pneg %p178
      %p328 = pneg %p202
      %p329 = pneg %p199
      %p330 = pneg %p228
      %p331 = pneg %p225
      %p332 = scmp.lt.s32.totalorder %s19, 1
      %s333 = scalar_select %p332, %s19, 1
      %s334 = smul.addr %s333, 2
      %s335 = smul.addr %s334, 8
      %s336 = scalar_lea.vmem %s8, %s335
      %p337 = scmp.lt.s32.totalorder %s19, 1
      %s338 = scalar_select %p337, %s19, 1
      %s339 = smul.addr %s338, 2
      %s340 = smul.addr %s339, 4
      %s341 = scalar_lea.vmem %s0, %s340
      %p342 = scmp.lt.s32.totalorder %s19, 1
      %s343 = scalar_select %p342, %s19, 1
      %s344 = smul.addr %s343, 2
      %s345 = smul.addr %s344, 2
      %s346 = scalar_lea.vmem %s1, %s345
      %p347 = scmp.lt.s32.totalorder %s19, 1
      %s348 = scalar_select %p347, %s19, 1
      %s349 = smul.addr %s348, 4
      %s350 = scalar_lea.vmem %s2, %s349
      %p351 = scmp.lt.s32.totalorder %s19, 1
      %s352 = scalar_select %p351, %s19, 1
      %s353 = smul.addr %s352, 8
      %s354 = scalar_lea.vmem %s3, %s353
      %p355 = scmp.lt.s32.totalorder %s19, 1
      %s356 = scalar_select %p355, %s19, 1
      %s357 = smul.addr %s356, 2
      %s358 = smul.addr %s357, 8
      %s359 = scalar_lea.vmem %s8, %s358
      %v361 = vld [vmem:[%s341] sm:$0xff]
      %v362 = vld [vmem:[%s346] sm:$0xf]
      %v363 = vld [vmem:[%s350] sm:$0xf]
      %v364 = vld [vmem:[%s354] sm:$0xff]
      %v365 = vld [vmem:[%s7] sm:$0xff]
      %v366 = vlaneseq
      %v367 = vand.u32 %v366, 127
      %v368 = vadd.s32 %v367, 128
      %v369 = vand.u32 %v367, 15
      %v370 = vand.u32 %v368, 15
      %vm371 = vcmp.ge.s32.totalorder %v367, 16
      %vm372 = vcmp.ge.s32.totalorder %v368, 16
      %vm373 = vcmp.lt.s32.totalorder %v367, 240
      %vm374 = vcmp.lt.s32.totalorder %v368, 240
      %vm375 = vcmp.ge.s32.totalorder %v369, 1
      %vm376 = vcmp.ge.s32.totalorder %v370, 1
      %vm377 = vcmp.lt.s32.totalorder %v369, 15
      %vm378 = vcmp.lt.s32.totalorder %v370, 15
      %vm379 = vmand %vm371, %vm375
      %vm380 = vmand %vm372, %vm376
      %vm381 = vmand %vm371, %vm377
      %vm382 = vmand %vm372, %vm378
      %vm383 = vmand %vm373, %vm375
      %vm384 = vmand %vm374, %vm376
      %vm385 = vmand %vm373, %vm377
      %vm386 = vmand %vm374, %vm378
      %388 = vset.pattern.permute.xlu0 0
      %389 = vperm.xlu0 %388, %v363
      %v390 = vpop.permute.xlu0 %389
      %v392 = vunpack.c.l.s4 839922192
      %v393 = vunpack.c.0.s8 %v392
      %v394 = vlaneseq
      %v395 = vshrl.u32 %v394, 7
      %v396 = vsub.s32 %v393, %v395
      %v397 = vrot.slane %v390, %v396
      %v399 = vmul.f32 %v361, %v397
      %v401 = vcombine.high %v399, %v399
      %403 = vrot.lane.b32.xlu0 %v399, 17
      %v404 = vpop.permute.xlu0 %403
      %405 = vrot.lane.b32.xlu0 %v401, 17
      %v406 = vpop.permute.xlu0 %405
      %vm407 = vcmp.lt.s32.totalorder %v367, 17
      %v408 = vsel %vm407, %v404, %v406
      %v409 = vsel %vm407, %v406, %v404
      %v410 = vsel %vm379, 1, 0
      %v411 = vsel %vm380, 1, 0
      %vm412 = vcmp.eq.s32.totalorder %v410, 1
      %vm413 = vcmp.eq.s32.totalorder %v411, 1
      %v414 = vsel %vm412, %v409, 0.0
      %v415 = vsel %vm413, %v408, 0.0
      %v416 = vld [vmem:[%s4] sm:$0xf]
      %v417 = vpack.c.bf16 %v414, %v414
      %v418 = vpack.c.bf16 %v415, %v415
      %419 = vrot.lane.b32.xlu0 %v399, 16
      %v420 = vpop.permute.xlu0 %419
      %421 = vrot.lane.b32.xlu0 %v401, 16
      %v422 = vpop.permute.xlu0 %421
      %vm423 = vcmp.lt.s32.totalorder %v367, 16
      %v424 = vsel %vm423, %v420, %v422
      %v425 = vsel %vm423, %v422, %v420
      %v426 = vsel %vm371, 1, 0
      %v427 = vsel %vm372, 1, 0
      %vm428 = vcmp.eq.s32.totalorder %v426, 1
      %vm429 = vcmp.eq.s32.totalorder %v427, 1
      %v430 = vsel %vm428, %v425, 0.0
      %v431 = vsel %vm429, %v424, 0.0
      %s432 = scalar_lea.vmem %s4, 4
      %v433 = vld [vmem:[%s432] sm:$0xf]
      %v434 = vpack.c.bf16 %v430, %v430
      %v435 = vpack.c.bf16 %v431, %v431
      %vm436 = vcmask 31744
      %v438 = vsel %vm436, %v433, 0
      %vm440 = vcmask 1041408
      %v442 = vsel %vm440, %v434, 0
      %v445 = vsel %vm440, %v435, 0
      %447 = vmatprep.subr.bf16.mxu0 %v445
      %448 = vmatpush1.bf16.msra.mxu0 %v442
      %449 = vmatprep.subr.bf16.mxu0 0
      %450 = vmatpush1.bf16.msra.mxu0 0
      %451 = vmatprep.subr.bf16.mxu0 0
      %452 = vmatpush1.bf16.msra.mxu0 0
      %453 = vmatprep.subr.bf16.mxu0 0
      %454 = vmatpush1.bf16.msra.mxu0 0
      %455 = vmatprep.subr.bf16.mxu0 0
      %456 = vmatpush1.bf16.msra.mxu0 0
      %457 = vmatprep.subr.bf16.mxu0 0
      %458 = vmatpush1.bf16.msra.mxu0 0
      %459 = vmatprep.subr.bf16.mxu0 0
      %460 = vmatpush1.bf16.msra.mxu0 0
      %461 = vmatprep.subr.bf16.mxu0 0
      %462 = vmatpush1.bf16.msra.mxu0 0
      %463 = vmatprep.subr.bf16.mxu0 0
      %464 = vmatpush1.bf16.msra.mxu0 0
      %465 = vmatprep.subr.bf16.mxu0 0
      %466 = vmatpush1.bf16.msra.mxu0 0
      %467 = vmatprep.subr.bf16.mxu0 0
      %468 = vmatpush1.bf16.msra.mxu0 0
      %469 = vmatprep.subr.bf16.mxu0 0
      %470 = vmatpush1.bf16.msra.mxu0 0
      %471 = vmatprep.subr.bf16.mxu0 0
      %472 = vmatpush1.bf16.msra.mxu0 0
      %473 = vmatprep.subr.bf16.mxu0 0
      %474 = vmatpush1.bf16.msra.mxu0 0
      %475 = vmatprep.subr.bf16.mxu0 0
      %476 = vmatpush1.bf16.msra.mxu0 0
      %477 = vmatprep.subr.bf16.mxu0 0
      %478 = vmatpush1.bf16.msra.mxu0 0
      %479 = vmatprep.mubr.bf16.mxu0 0
      %480 = vmatmul.mubr.bf16.gmra.mrb[0].mxu0 %v438
      %v481 = vpop.f32.mrb[0].mxu0
      %v482 = vadd.f32 0.0, %v481
      %v483 = vpop.f32.mrb[0].mxu0
      %v484 = vadd.f32 0.0, %v483
      %v485 = vpop.f32.mrb[0].mxu0
      %v486 = vpop.f32.mrb[0].mxu0
      %487 = vdwg.mxu0
      %v489 = vsel %vm436, %v416, 0
      %v492 = vsel %vm440, %v417, 0
      %v495 = vsel %vm440, %v418, 0
      %497 = vmatprep.subr.bf16.mxu0 %v495
      %498 = vmatpush1.bf16.msra.mxu0 %v492
      %499 = vmatprep.subr.bf16.mxu0 0
      %500 = vmatpush1.bf16.msra.mxu0 0
      %501 = vmatprep.subr.bf16.mxu0 0
      %502 = vmatpush1.bf16.msra.mxu0 0
      %503 = vmatprep.subr.bf16.mxu0 0
      %504 = vmatpush1.bf16.msra.mxu0 0
      %505 = vmatprep.subr.bf16.mxu0 0
      %506 = vmatpush1.bf16.msra.mxu0 0
      %507 = vmatprep.subr.bf16.mxu0 0
      %508 = vmatpush1.bf16.msra.mxu0 0
      %509 = vmatprep.subr.bf16.mxu0 0
      %510 = vmatpush1.bf16.msra.mxu0 0
      %511 = vmatprep.subr.bf16.mxu0 0
      %512 = vmatpush1.bf16.msra.mxu0 0
      %513 = vmatprep.subr.bf16.mxu0 0
      %514 = vmatpush1.bf16.msra.mxu0 0
      %515 = vmatprep.subr.bf16.mxu0 0
      %516 = vmatpush1.bf16.msra.mxu0 0
      %517 = vmatprep.subr.bf16.mxu0 0
      %518 = vmatpush1.bf16.msra.mxu0 0
      %519 = vmatprep.subr.bf16.mxu0 0
      %520 = vmatpush1.bf16.msra.mxu0 0
      %521 = vmatprep.subr.bf16.mxu0 0
      %522 = vmatpush1.bf16.msra.mxu0 0
      %523 = vmatprep.subr.bf16.mxu0 0
      %524 = vmatpush1.bf16.msra.mxu0 0
      %525 = vmatprep.subr.bf16.mxu0 0
      %526 = vmatpush1.bf16.msra.mxu0 0
      %527 = vmatprep.subr.bf16.mxu0 0
      %528 = vmatpush1.bf16.msra.mxu0 0
      %529 = vmatprep.mubr.bf16.mxu0 0
      %530 = vmatmul.mubr.bf16.gmra.mrb[0].mxu0 %v489
      %v531 = vpop.f32.mrb[0].mxu0
      %v532 = vadd.f32 %v482, %v531
      %v533 = vpop.f32.mrb[0].mxu0
      %v534 = vadd.f32 %v484, %v533
      %v535 = vpop.f32.mrb[0].mxu0
      %v536 = vpop.f32.mrb[0].mxu0
      %537 = vdwg.mxu0
      %538 = vrot.lane.b32.xlu0 %v399, 15
      %v539 = vpop.permute.xlu0 %538
      %540 = vrot.lane.b32.xlu0 %v401, 15
      %v541 = vpop.permute.xlu0 %540
      %vm542 = vcmp.lt.s32.totalorder %v367, 15
      %v543 = vsel %vm542, %v539, %v541
      %v544 = vsel %vm542, %v541, %v539
      %v545 = vsel %vm381, 1, 0
      %v546 = vsel %vm382, 1, 0
      %vm547 = vcmp.eq.s32.totalorder %v545, 1
      %vm548 = vcmp.eq.s32.totalorder %v546, 1
      %v549 = vsel %vm547, %v544, 0.0
      %v550 = vsel %vm548, %v543, 0.0
      %s551 = scalar_lea.vmem %s4, 8
      %v552 = vld [vmem:[%s551] sm:$0xf]
      %v553 = vpack.c.bf16 %v549, %v549
      %v554 = vpack.c.bf16 %v550, %v550
      %v556 = vsel %vm436, %v552, 0
      %v559 = vsel %vm440, %v553, 0
      %v562 = vsel %vm440, %v554, 0
      %564 = vmatprep.subr.bf16.mxu0 %v562
      %565 = vmatpush1.bf16.msra.mxu0 %v559
      %566 = vmatprep.subr.bf16.mxu0 0
      %567 = vmatpush1.bf16.msra.mxu0 0
      %568 = vmatprep.subr.bf16.mxu0 0
      %569 = vmatpush1.bf16.msra.mxu0 0
      %570 = vmatprep.subr.bf16.mxu0 0
      %571 = vmatpush1.bf16.msra.mxu0 0
      %572 = vmatprep.subr.bf16.mxu0 0
      %573 = vmatpush1.bf16.msra.mxu0 0
      %574 = vmatprep.subr.bf16.mxu0 0
      %575 = vmatpush1.bf16.msra.mxu0 0
      %576 = vmatprep.subr.bf16.mxu0 0
      %577 = vmatpush1.bf16.msra.mxu0 0
      %578 = vmatprep.subr.bf16.mxu0 0
      %579 = vmatpush1.bf16.msra.mxu0 0
      %580 = vmatprep.subr.bf16.mxu0 0
      %581 = vmatpush1.bf16.msra.mxu0 0
      %582 = vmatprep.subr.bf16.mxu0 0
      %583 = vmatpush1.bf16.msra.mxu0 0
      %584 = vmatprep.subr.bf16.mxu0 0
      %585 = vmatpush1.bf16.msra.mxu0 0
      %586 = vmatprep.subr.bf16.mxu0 0
      %587 = vmatpush1.bf16.msra.mxu0 0
      %588 = vmatprep.subr.bf16.mxu0 0
      %589 = vmatpush1.bf16.msra.mxu0 0
      %590 = vmatprep.subr.bf16.mxu0 0
      %591 = vmatpush1.bf16.msra.mxu0 0
      %592 = vmatprep.subr.bf16.mxu0 0
      %593 = vmatpush1.bf16.msra.mxu0 0
      %594 = vmatprep.subr.bf16.mxu0 0
      %595 = vmatpush1.bf16.msra.mxu0 0
      %596 = vmatprep.mubr.bf16.mxu0 0
      %597 = vmatmul.mubr.bf16.gmra.mrb[0].mxu0 %v556
      %v598 = vpop.f32.mrb[0].mxu0
      %v599 = vadd.f32 0.0, %v598
      %v600 = vpop.f32.mrb[0].mxu0
      %v601 = vadd.f32 0.0, %v600
      %v602 = vpop.f32.mrb[0].mxu0
      %v603 = vpop.f32.mrb[0].mxu0
      %604 = vdwg.mxu0
      %v605 = vadd.f32 %v532, %v599
      %v606 = vadd.f32 %v534, %v601
      %607 = vrot.lane.b32.xlu0 %v399, 1
      %v608 = vpop.permute.xlu0 %607
      %609 = vrot.lane.b32.xlu0 %v401, 1
      %v610 = vpop.permute.xlu0 %609
      %vm611 = vcmp.lt.s32.totalorder %v367, 1
      %v612 = vsel %vm611, %v608, %v610
      %v613 = vsel %vm611, %v610, %v608
      %v614 = vsel %vm375, 1, 0
      %v615 = vsel %vm376, 1, 0
      %vm616 = vcmp.eq.s32.totalorder %v614, 1
      %vm617 = vcmp.eq.s32.totalorder %v615, 1
      %v618 = vsel %vm616, %v613, 0.0
      %v619 = vsel %vm617, %v612, 0.0
      %s620 = scalar_lea.vmem %s4, 12
      %v621 = vld [vmem:[%s620] sm:$0xf]
      %v622 = vpack.c.bf16 %v618, %v618
      %v623 = vpack.c.bf16 %v619, %v619
      %v625 = vsel %vm436, %v621, 0
      %v628 = vsel %vm440, %v622, 0
      %v631 = vsel %vm440, %v623, 0
      %633 = vmatprep.subr.bf16.mxu0 %v631
      %634 = vmatpush1.bf16.msra.mxu0 %v628
      %635 = vmatprep.subr.bf16.mxu0 0
      %636 = vmatpush1.bf16.msra.mxu0 0
      %637 = vmatprep.subr.bf16.mxu0 0
      %638 = vmatpush1.bf16.msra.mxu0 0
      %639 = vmatprep.subr.bf16.mxu0 0
      %640 = vmatpush1.bf16.msra.mxu0 0
      %641 = vmatprep.subr.bf16.mxu0 0
      %642 = vmatpush1.bf16.msra.mxu0 0
      %643 = vmatprep.subr.bf16.mxu0 0
      %644 = vmatpush1.bf16.msra.mxu0 0
      %645 = vmatprep.subr.bf16.mxu0 0
      %646 = vmatpush1.bf16.msra.mxu0 0
      %647 = vmatprep.subr.bf16.mxu0 0
      %648 = vmatpush1.bf16.msra.mxu0 0
      %649 = vmatprep.subr.bf16.mxu0 0
      %650 = vmatpush1.bf16.msra.mxu0 0
      %651 = vmatprep.subr.bf16.mxu0 0
      %652 = vmatpush1.bf16.msra.mxu0 0
      %653 = vmatprep.subr.bf16.mxu0 0
      %654 = vmatpush1.bf16.msra.mxu0 0
      %655 = vmatprep.subr.bf16.mxu0 0
      %656 = vmatpush1.bf16.msra.mxu0 0
      %657 = vmatprep.subr.bf16.mxu0 0
      %658 = vmatpush1.bf16.msra.mxu0 0
      %659 = vmatprep.subr.bf16.mxu0 0
      %660 = vmatpush1.bf16.msra.mxu0 0
      %661 = vmatprep.subr.bf16.mxu0 0
      %662 = vmatpush1.bf16.msra.mxu0 0
      %663 = vmatprep.subr.bf16.mxu0 0
      %664 = vmatpush1.bf16.msra.mxu0 0
      %665 = vmatprep.mubr.bf16.mxu0 0
      %666 = vmatmul.mubr.bf16.gmra.mrb[0].mxu0 %v625
      %v667 = vpop.f32.mrb[0].mxu0
      %v668 = vadd.f32 0.0, %v667
      %v669 = vpop.f32.mrb[0].mxu0
      %v670 = vadd.f32 0.0, %v669
      %v671 = vpop.f32.mrb[0].mxu0
      %v672 = vpop.f32.mrb[0].mxu0
      %673 = vdwg.mxu0
      %v674 = vadd.f32 %v605, %v668
      %v675 = vadd.f32 %v606, %v670
      %s676 = scalar_lea.vmem %s4, 16
      %v677 = vld [vmem:[%s676] sm:$0xf]
      %v678 = vpack.c.bf16 %v399, %v399
      %v679 = vpack.c.bf16 %v401, %v401
      %v681 = vsel %vm436, %v677, 0
      %v684 = vsel %vm440, %v678, 0
      %v687 = vsel %vm440, %v679, 0
      %689 = vmatprep.subr.bf16.mxu0 %v687
      %690 = vmatpush1.bf16.msra.mxu0 %v684
      %691 = vmatprep.subr.bf16.mxu0 0
      %692 = vmatpush1.bf16.msra.mxu0 0
      %693 = vmatprep.subr.bf16.mxu0 0
      %694 = vmatpush1.bf16.msra.mxu0 0
      %695 = vmatprep.subr.bf16.mxu0 0
      %696 = vmatpush1.bf16.msra.mxu0 0
      %697 = vmatprep.subr.bf16.mxu0 0
      %698 = vmatpush1.bf16.msra.mxu0 0
      %699 = vmatprep.subr.bf16.mxu0 0
      %700 = vmatpush1.bf16.msra.mxu0 0
      %701 = vmatprep.subr.bf16.mxu0 0
      %702 = vmatpush1.bf16.msra.mxu0 0
      %703 = vmatprep.subr.bf16.mxu0 0
      %704 = vmatpush1.bf16.msra.mxu0 0
      %705 = vmatprep.subr.bf16.mxu0 0
      %706 = vmatpush1.bf16.msra.mxu0 0
      %707 = vmatprep.subr.bf16.mxu0 0
      %708 = vmatpush1.bf16.msra.mxu0 0
      %709 = vmatprep.subr.bf16.mxu0 0
      %710 = vmatpush1.bf16.msra.mxu0 0
      %711 = vmatprep.subr.bf16.mxu0 0
      %712 = vmatpush1.bf16.msra.mxu0 0
      %713 = vmatprep.subr.bf16.mxu0 0
      %714 = vmatpush1.bf16.msra.mxu0 0
      %715 = vmatprep.subr.bf16.mxu0 0
      %716 = vmatpush1.bf16.msra.mxu0 0
      %717 = vmatprep.subr.bf16.mxu0 0
      %718 = vmatpush1.bf16.msra.mxu0 0
      %719 = vmatprep.subr.bf16.mxu0 0
      %720 = vmatpush1.bf16.msra.mxu0 0
      %721 = vmatprep.mubr.bf16.mxu0 0
      %722 = vmatmul.mubr.bf16.gmra.mrb[0].mxu0 %v681
      %v723 = vpop.f32.mrb[0].mxu0
      %v724 = vadd.f32 0.0, %v723
      %v725 = vpop.f32.mrb[0].mxu0
      %v726 = vadd.f32 0.0, %v725
      %v727 = vpop.f32.mrb[0].mxu0
      %v728 = vpop.f32.mrb[0].mxu0
      %729 = vdwg.mxu0
      %v730 = vadd.f32 %v674, %v724
      %v731 = vadd.f32 %v675, %v726
      %732 = vrot.lane.b32.xlu0 %v399, 127
      %v733 = vpop.permute.xlu0 %732
      %734 = vrot.lane.b32.xlu0 %v401, 127
      %v735 = vpop.permute.xlu0 %734
      %vm736 = vcmp.lt.s32.totalorder %v367, 127
      %v737 = vsel %vm736, %v733, %v735
      %v738 = vsel %vm736, %v735, %v733
      %v739 = vsel %vm377, 1, 0
      %v740 = vsel %vm378, 1, 0
      %vm741 = vcmp.eq.s32.totalorder %v739, 1
      %vm742 = vcmp.eq.s32.totalorder %v740, 1
      %v743 = vsel %vm741, %v737, 0.0
      %v744 = vsel %vm742, %v738, 0.0
      %s745 = scalar_lea.vmem %s4, 20
      %v746 = vld [vmem:[%s745] sm:$0xf]
      %v747 = vpack.c.bf16 %v743, %v743
      %v748 = vpack.c.bf16 %v744, %v744
      %v750 = vsel %vm436, %v746, 0
      %v753 = vsel %vm440, %v747, 0
      %v756 = vsel %vm440, %v748, 0
      %758 = vmatprep.subr.bf16.mxu0 %v756
      %759 = vmatpush1.bf16.msra.mxu0 %v753
      %760 = vmatprep.subr.bf16.mxu0 0
      %761 = vmatpush1.bf16.msra.mxu0 0
      %762 = vmatprep.subr.bf16.mxu0 0
      %763 = vmatpush1.bf16.msra.mxu0 0
      %764 = vmatprep.subr.bf16.mxu0 0
      %765 = vmatpush1.bf16.msra.mxu0 0
      %766 = vmatprep.subr.bf16.mxu0 0
      %767 = vmatpush1.bf16.msra.mxu0 0
      %768 = vmatprep.subr.bf16.mxu0 0
      %769 = vmatpush1.bf16.msra.mxu0 0
      %770 = vmatprep.subr.bf16.mxu0 0
      %771 = vmatpush1.bf16.msra.mxu0 0
      %772 = vmatprep.subr.bf16.mxu0 0
      %773 = vmatpush1.bf16.msra.mxu0 0
      %774 = vmatprep.subr.bf16.mxu0 0
      %775 = vmatpush1.bf16.msra.mxu0 0
      %776 = vmatprep.subr.bf16.mxu0 0
      %777 = vmatpush1.bf16.msra.mxu0 0
      %778 = vmatprep.subr.bf16.mxu0 0
      %779 = vmatpush1.bf16.msra.mxu0 0
      %780 = vmatprep.subr.bf16.mxu0 0
      %781 = vmatpush1.bf16.msra.mxu0 0
      %782 = vmatprep.subr.bf16.mxu0 0
      %783 = vmatpush1.bf16.msra.mxu0 0
      %784 = vmatprep.subr.bf16.mxu0 0
      %785 = vmatpush1.bf16.msra.mxu0 0
      %786 = vmatprep.subr.bf16.mxu0 0
      %787 = vmatpush1.bf16.msra.mxu0 0
      %788 = vmatprep.subr.bf16.mxu0 0
      %789 = vmatpush1.bf16.msra.mxu0 0
      %790 = vmatprep.mubr.bf16.mxu0 0
      %791 = vmatmul.mubr.bf16.gmra.mrb[0].mxu0 %v750
      %v792 = vpop.f32.mrb[0].mxu0
      %v793 = vadd.f32 0.0, %v792
      %v794 = vpop.f32.mrb[0].mxu0
      %v795 = vadd.f32 0.0, %v794
      %v796 = vpop.f32.mrb[0].mxu0
      %v797 = vpop.f32.mrb[0].mxu0
      %798 = vdwg.mxu0
      %v799 = vadd.f32 %v730, %v793
      %v800 = vadd.f32 %v731, %v795
      %801 = vrot.lane.b32.xlu0 %v399, 113
      %v802 = vpop.permute.xlu0 %801
      %803 = vrot.lane.b32.xlu0 %v401, 113
      %v804 = vpop.permute.xlu0 %803
      %vm805 = vcmp.lt.s32.totalorder %v367, 113
      %v806 = vsel %vm805, %v802, %v804
      %v807 = vsel %vm805, %v804, %v802
      %v808 = vsel %vm383, 1, 0
      %v809 = vsel %vm384, 1, 0
      %vm810 = vcmp.eq.s32.totalorder %v808, 1
      %vm811 = vcmp.eq.s32.totalorder %v809, 1
      %v812 = vsel %vm810, %v806, 0.0
      %v813 = vsel %vm811, %v807, 0.0
      %s814 = scalar_lea.vmem %s4, 24
      %v815 = vld [vmem:[%s814] sm:$0xf]
      %v816 = vpack.c.bf16 %v812, %v812
      %v817 = vpack.c.bf16 %v813, %v813
      %v819 = vsel %vm436, %v815, 0
      %v822 = vsel %vm440, %v816, 0
      %v825 = vsel %vm440, %v817, 0
      %827 = vmatprep.subr.bf16.mxu0 %v825
      %828 = vmatpush1.bf16.msra.mxu0 %v822
      %829 = vmatprep.subr.bf16.mxu0 0
      %830 = vmatpush1.bf16.msra.mxu0 0
      %831 = vmatprep.subr.bf16.mxu0 0
      %832 = vmatpush1.bf16.msra.mxu0 0
      %833 = vmatprep.subr.bf16.mxu0 0
      %834 = vmatpush1.bf16.msra.mxu0 0
      %835 = vmatprep.subr.bf16.mxu0 0
      %836 = vmatpush1.bf16.msra.mxu0 0
      %837 = vmatprep.subr.bf16.mxu0 0
      %838 = vmatpush1.bf16.msra.mxu0 0
      %839 = vmatprep.subr.bf16.mxu0 0
      %840 = vmatpush1.bf16.msra.mxu0 0
      %841 = vmatprep.subr.bf16.mxu0 0
      %842 = vmatpush1.bf16.msra.mxu0 0
      %843 = vmatprep.subr.bf16.mxu0 0
      %844 = vmatpush1.bf16.msra.mxu0 0
      %845 = vmatprep.subr.bf16.mxu0 0
      %846 = vmatpush1.bf16.msra.mxu0 0
      %847 = vmatprep.subr.bf16.mxu0 0
      %848 = vmatpush1.bf16.msra.mxu0 0
      %849 = vmatprep.subr.bf16.mxu0 0
      %850 = vmatpush1.bf16.msra.mxu0 0
      %851 = vmatprep.subr.bf16.mxu0 0
      %852 = vmatpush1.bf16.msra.mxu0 0
      %853 = vmatprep.subr.bf16.mxu0 0
      %854 = vmatpush1.bf16.msra.mxu0 0
      %855 = vmatprep.subr.bf16.mxu0 0
      %856 = vmatpush1.bf16.msra.mxu0 0
      %857 = vmatprep.subr.bf16.mxu0 0
      %858 = vmatpush1.bf16.msra.mxu0 0
      %859 = vmatprep.mubr.bf16.mxu0 0
      %860 = vmatmul.mubr.bf16.gmra.mrb[0].mxu0 %v819
      %v861 = vpop.f32.mrb[0].mxu0
      %v862 = vadd.f32 0.0, %v861
      %v863 = vpop.f32.mrb[0].mxu0
      %v864 = vadd.f32 0.0, %v863
      %v865 = vpop.f32.mrb[0].mxu0
      %v866 = vpop.f32.mrb[0].mxu0
      %867 = vdwg.mxu0
      %v868 = vadd.f32 %v799, %v862
      %v869 = vadd.f32 %v800, %v864
      %870 = vrot.lane.b32.xlu0 %v399, 112
      %v871 = vpop.permute.xlu0 %870
      %872 = vrot.lane.b32.xlu0 %v401, 112
      %v873 = vpop.permute.xlu0 %872
      %vm874 = vcmp.lt.s32.totalorder %v367, 112
      %v875 = vsel %vm874, %v871, %v873
      %v876 = vsel %vm874, %v873, %v871
      %v877 = vsel %vm373, 1, 0
      %v878 = vsel %vm374, 1, 0
      %vm879 = vcmp.eq.s32.totalorder %v877, 1
      %vm880 = vcmp.eq.s32.totalorder %v878, 1
      %v881 = vsel %vm879, %v875, 0.0
      %v882 = vsel %vm880, %v876, 0.0
      %s883 = scalar_lea.vmem %s4, 28
      %v884 = vld [vmem:[%s883] sm:$0xf]
      %v885 = vpack.c.bf16 %v881, %v881
      %v886 = vpack.c.bf16 %v882, %v882
      %v888 = vsel %vm436, %v884, 0
      %v891 = vsel %vm440, %v885, 0
      %v894 = vsel %vm440, %v886, 0
      %896 = vmatprep.subr.bf16.mxu0 %v894
      %897 = vmatpush1.bf16.msra.mxu0 %v891
      %898 = vmatprep.subr.bf16.mxu0 0
      %899 = vmatpush1.bf16.msra.mxu0 0
      %900 = vmatprep.subr.bf16.mxu0 0
      %901 = vmatpush1.bf16.msra.mxu0 0
      %902 = vmatprep.subr.bf16.mxu0 0
      %903 = vmatpush1.bf16.msra.mxu0 0
      %904 = vmatprep.subr.bf16.mxu0 0
      %905 = vmatpush1.bf16.msra.mxu0 0
      %906 = vmatprep.subr.bf16.mxu0 0
      %907 = vmatpush1.bf16.msra.mxu0 0
      %908 = vmatprep.subr.bf16.mxu0 0
      %909 = vmatpush1.bf16.msra.mxu0 0
      %910 = vmatprep.subr.bf16.mxu0 0
      %911 = vmatpush1.bf16.msra.mxu0 0
      %912 = vmatprep.subr.bf16.mxu0 0
      %913 = vmatpush1.bf16.msra.mxu0 0
      %914 = vmatprep.subr.bf16.mxu0 0
      %915 = vmatpush1.bf16.msra.mxu0 0
      %916 = vmatprep.subr.bf16.mxu0 0
      %917 = vmatpush1.bf16.msra.mxu0 0
      %918 = vmatprep.subr.bf16.mxu0 0
      %919 = vmatpush1.bf16.msra.mxu0 0
      %920 = vmatprep.subr.bf16.mxu0 0
      %921 = vmatpush1.bf16.msra.mxu0 0
      %922 = vmatprep.subr.bf16.mxu0 0
      %923 = vmatpush1.bf16.msra.mxu0 0
      %924 = vmatprep.subr.bf16.mxu0 0
      %925 = vmatpush1.bf16.msra.mxu0 0
      %926 = vmatprep.subr.bf16.mxu0 0
      %927 = vmatpush1.bf16.msra.mxu0 0
      %928 = vmatprep.mubr.bf16.mxu0 0
      %929 = vmatmul.mubr.bf16.gmra.mrb[0].mxu0 %v888
      %v930 = vpop.f32.mrb[0].mxu0
      %v931 = vadd.f32 0.0, %v930
      %v932 = vpop.f32.mrb[0].mxu0
      %v933 = vadd.f32 0.0, %v932
      %v934 = vpop.f32.mrb[0].mxu0
      %v935 = vpop.f32.mrb[0].mxu0
      %936 = vdwg.mxu0
      %v937 = vadd.f32 %v868, %v931
      %v938 = vadd.f32 %v869, %v933
      %939 = vrot.lane.b32.xlu0 %v399, 111
      %v940 = vpop.permute.xlu0 %939
      %941 = vrot.lane.b32.xlu0 %v401, 111
      %v942 = vpop.permute.xlu0 %941
      %vm943 = vcmp.lt.s32.totalorder %v367, 111
      %v944 = vsel %vm943, %v940, %v942
      %v945 = vsel %vm943, %v942, %v940
      %v946 = vsel %vm385, 1, 0
      %v947 = vsel %vm386, 1, 0
      %vm948 = vcmp.eq.s32.totalorder %v946, 1
      %vm949 = vcmp.eq.s32.totalorder %v947, 1
      %v950 = vsel %vm948, %v944, 0.0
      %v951 = vsel %vm949, %v945, 0.0
      %s952 = scalar_lea.vmem %s4, 32
      %v953 = vld [vmem:[%s952] sm:$0xf]
      %v954 = vpack.c.bf16 %v950, %v950
      %v955 = vpack.c.bf16 %v951, %v951
      %v957 = vsel %vm436, %v953, 0
      %v960 = vsel %vm440, %v954, 0
      %v963 = vsel %vm440, %v955, 0
      %965 = vmatprep.subr.bf16.mxu0 %v963
      %966 = vmatpush1.bf16.msra.mxu0 %v960
      %967 = vmatprep.subr.bf16.mxu0 0
      %968 = vmatpush1.bf16.msra.mxu0 0
      %969 = vmatprep.subr.bf16.mxu0 0
      %970 = vmatpush1.bf16.msra.mxu0 0
      %971 = vmatprep.subr.bf16.mxu0 0
      %972 = vmatpush1.bf16.msra.mxu0 0
      %973 = vmatprep.subr.bf16.mxu0 0
      %974 = vmatpush1.bf16.msra.mxu0 0
      %975 = vmatprep.subr.bf16.mxu0 0
      %976 = vmatpush1.bf16.msra.mxu0 0
      %977 = vmatprep.subr.bf16.mxu0 0
      %978 = vmatpush1.bf16.msra.mxu0 0
      %979 = vmatprep.subr.bf16.mxu0 0
      %980 = vmatpush1.bf16.msra.mxu0 0
      %981 = vmatprep.subr.bf16.mxu0 0
      %982 = vmatpush1.bf16.msra.mxu0 0
      %983 = vmatprep.subr.bf16.mxu0 0
      %984 = vmatpush1.bf16.msra.mxu0 0
      %985 = vmatprep.subr.bf16.mxu0 0
      %986 = vmatpush1.bf16.msra.mxu0 0
      %987 = vmatprep.subr.bf16.mxu0 0
      %988 = vmatpush1.bf16.msra.mxu0 0
      %989 = vmatprep.subr.bf16.mxu0 0
      %990 = vmatpush1.bf16.msra.mxu0 0
      %991 = vmatprep.subr.bf16.mxu0 0
      %992 = vmatpush1.bf16.msra.mxu0 0
      %993 = vmatprep.subr.bf16.mxu0 0
      %994 = vmatpush1.bf16.msra.mxu0 0
      %995 = vmatprep.subr.bf16.mxu0 0
      %996 = vmatpush1.bf16.msra.mxu0 0
      %997 = vmatprep.mubr.bf16.mxu0 0
      %998 = vmatmul.mubr.bf16.gmra.mrb[0].mxu0 %v957
      %v999 = vpop.f32.mrb[0].mxu0
      %v1000 = vadd.f32 0.0, %v999
      %v1001 = vpop.f32.mrb[0].mxu0
      %v1002 = vadd.f32 0.0, %v1001
      %v1003 = vpop.f32.mrb[0].mxu0
      %v1004 = vpop.f32.mrb[0].mxu0
      %1005 = vdwg.mxu0
      %v1006 = vadd.f32 %v937, %v1000
      %v1007 = vadd.f32 %v938, %v1002
      %1009 = vset.pattern.permute.xlu0 1
      %1010 = vperm.xlu0 %1009, %v364
      %v1011 = vpop.permute.xlu0 %1010
      %v1013 = vmul.f32 %v1006, %v1011
      %v1014 = vmul.f32 %v1007, %v1011
      %v1016 = vlaneseq
      %v1017 = vshrl.u32 %v1016, 7
      %v1018 = vsub.s32 0, %v1017
      %v1019 = vrot.slane %v362, %v1018
      %v1020 = vlaneseq
      %v1021 = vshrl.u32 %v1020, 7
      %v1022 = vsub.s32 2, %v1021
      %v1023 = vrot.slane %v362, %v1022
      %v1026 = vlaneseq
      %v1027 = vshrl.u32 %v1026, 7
      %v1028 = vsub.s32 0, %v1027
      %v1029 = vrot.slane %v1019, %v1028
      %v1030 = vlaneseq
      %v1031 = vshrl.u32 %v1030, 7
      %v1032 = vsub.s32 0, %v1031
      %v1033 = vrot.slane %v1023, %v1032
      %v1034 = vadd.f32 %v1013, %v1029
      %v1035 = vadd.f32 %v1014, %v1033
      %1037 = vset.pattern.permute.xlu0 0
      %1038 = vperm.xlu0 %1037, %v365
      %v1039 = vpop.permute.xlu0 %1038
      %v1041 = vadd.f32 %v1034, %v1039
      %v1042 = vadd.f32 %v1035, %v1039
      %vm1043 = vcmp.ge.f32.partialorder %v1041, 0.0
      %vm1044 = vcmp.ge.f32.partialorder %v1042, 0.0
      %v1045 = vmul.f32 %v1041, 0.2
      %v1046 = vmul.f32 %v1042, 0.2
      %v1047 = vsel %vm1043, %v1041, %v1045
      %v1048 = vsel %vm1044, %v1042, %v1046
      %1049 = vset.pattern.permute.xlu0 0
      %1050 = vperm.xlu0 %1049, %v364
      %v1051 = vpop.permute.xlu0 %1050
      %v1053 = vmul.f32 %v1047, %v1051
      %v1054 = vmul.f32 %v1048, %v1051
      %1055 = vrot.lane.b32.xlu0 %v1053, 17
      %v1056 = vpop.permute.xlu0 %1055
      %1057 = vrot.lane.b32.xlu0 %v1054, 17
      %v1058 = vpop.permute.xlu0 %1057
      %v1059 = vsel %vm407, %v1056, %v1058
      %v1060 = vsel %vm407, %v1058, %v1056
      %v1061 = vsel %vm412, %v1060, 0.0
      %v1062 = vsel %vm413, %v1059, 0.0
      %v1063 = vld [vmem:[%s5] sm:$0xf]
      %v1064 = vpack.c.bf16 %v1061, %v1061
      %v1065 = vpack.c.bf16 %v1062, %v1062
      %1066 = vrot.lane.b32.xlu0 %v1053, 16
      %v1067 = vpop.permute.xlu0 %1066
      %1068 = vrot.lane.b32.xlu0 %v1054, 16
      %v1069 = vpop.permute.xlu0 %1068
      %v1070 = vsel %vm423, %v1067, %v1069
      %v1071 = vsel %vm423, %v1069, %v1067
      %v1072 = vsel %vm428, %v1071, 0.0
      %v1073 = vsel %vm429, %v1070, 0.0
      %s1074 = scalar_lea.vmem %s5, 4
      %v1075 = vld [vmem:[%s1074] sm:$0xf]
      %v1076 = vpack.c.bf16 %v1072, %v1072
      %v1077 = vpack.c.bf16 %v1073, %v1073
      %vm1078 = vcmask 64512
      %v1080 = vsel %vm1078, %v1075, 0
      %vm1082 = vcmask 1043456
      %v1084 = vsel %vm1082, %v1076, 0
      %v1087 = vsel %vm1082, %v1077, 0
      %1089 = vmatprep.subr.bf16.mxu0 %v1087
      %1090 = vmatpush1.bf16.msra.mxu0 %v1084
      %1091 = vmatprep.subr.bf16.mxu0 0
      %1092 = vmatpush1.bf16.msra.mxu0 0
      %1093 = vmatprep.subr.bf16.mxu0 0
      %1094 = vmatpush1.bf16.msra.mxu0 0
      %1095 = vmatprep.subr.bf16.mxu0 0
      %1096 = vmatpush1.bf16.msra.mxu0 0
      %1097 = vmatprep.subr.bf16.mxu0 0
      %1098 = vmatpush1.bf16.msra.mxu0 0
      %1099 = vmatprep.subr.bf16.mxu0 0
      %1100 = vmatpush1.bf16.msra.mxu0 0
      %1101 = vmatprep.subr.bf16.mxu0 0
      %1102 = vmatpush1.bf16.msra.mxu0 0
      %1103 = vmatprep.subr.bf16.mxu0 0
      %1104 = vmatpush1.bf16.msra.mxu0 0
      %1105 = vmatprep.subr.bf16.mxu0 0
      %1106 = vmatpush1.bf16.msra.mxu0 0
      %1107 = vmatprep.subr.bf16.mxu0 0
      %1108 = vmatpush1.bf16.msra.mxu0 0
      %1109 = vmatprep.subr.bf16.mxu0 0
      %1110 = vmatpush1.bf16.msra.mxu0 0
      %1111 = vmatprep.subr.bf16.mxu0 0
      %1112 = vmatpush1.bf16.msra.mxu0 0
      %1113 = vmatprep.subr.bf16.mxu0 0
      %1114 = vmatpush1.bf16.msra.mxu0 0
      %1115 = vmatprep.subr.bf16.mxu0 0
      %1116 = vmatpush1.bf16.msra.mxu0 0
      %1117 = vmatprep.subr.bf16.mxu0 0
      %1118 = vmatpush1.bf16.msra.mxu0 0
      %1119 = vmatprep.subr.bf16.mxu0 0
      %1120 = vmatpush1.bf16.msra.mxu0 0
      %1121 = vmatprep.mubr.bf16.mxu0 0
      %1122 = vmatmul.mubr.bf16.gmra.mrb[0].mxu0 %v1080
      %v1123 = vpop.f32.mrb[0].mxu0
      %v1124 = vadd.f32 0.0, %v1123
      %v1125 = vpop.f32.mrb[0].mxu0
      %v1126 = vadd.f32 0.0, %v1125
      %v1127 = vpop.f32.mrb[0].mxu0
      %v1128 = vpop.f32.mrb[0].mxu0
      %1129 = vdwg.mxu0
      %v1131 = vsel %vm1078, %v1063, 0
      %v1134 = vsel %vm1082, %v1064, 0
      %v1137 = vsel %vm1082, %v1065, 0
      %1139 = vmatprep.subr.bf16.mxu0 %v1137
      %1140 = vmatpush1.bf16.msra.mxu0 %v1134
      %1141 = vmatprep.subr.bf16.mxu0 0
      %1142 = vmatpush1.bf16.msra.mxu0 0
      %1143 = vmatprep.subr.bf16.mxu0 0
      %1144 = vmatpush1.bf16.msra.mxu0 0
      %1145 = vmatprep.subr.bf16.mxu0 0
      %1146 = vmatpush1.bf16.msra.mxu0 0
      %1147 = vmatprep.subr.bf16.mxu0 0
      %1148 = vmatpush1.bf16.msra.mxu0 0
      %1149 = vmatprep.subr.bf16.mxu0 0
      %1150 = vmatpush1.bf16.msra.mxu0 0
      %1151 = vmatprep.subr.bf16.mxu0 0
      %1152 = vmatpush1.bf16.msra.mxu0 0
      %1153 = vmatprep.subr.bf16.mxu0 0
      %1154 = vmatpush1.bf16.msra.mxu0 0
      %1155 = vmatprep.subr.bf16.mxu0 0
      %1156 = vmatpush1.bf16.msra.mxu0 0
      %1157 = vmatprep.subr.bf16.mxu0 0
      %1158 = vmatpush1.bf16.msra.mxu0 0
      %1159 = vmatprep.subr.bf16.mxu0 0
      %1160 = vmatpush1.bf16.msra.mxu0 0
      %1161 = vmatprep.subr.bf16.mxu0 0
      %1162 = vmatpush1.bf16.msra.mxu0 0
      %1163 = vmatprep.subr.bf16.mxu0 0
      %1164 = vmatpush1.bf16.msra.mxu0 0
      %1165 = vmatprep.subr.bf16.mxu0 0
      %1166 = vmatpush1.bf16.msra.mxu0 0
      %1167 = vmatprep.subr.bf16.mxu0 0
      %1168 = vmatpush1.bf16.msra.mxu0 0
      %1169 = vmatprep.subr.bf16.mxu0 0
      %1170 = vmatpush1.bf16.msra.mxu0 0
      %1171 = vmatprep.mubr.bf16.mxu0 0
      %1172 = vmatmul.mubr.bf16.gmra.mrb[0].mxu0 %v1131
      %v1173 = vpop.f32.mrb[0].mxu0
      %v1174 = vadd.f32 %v1124, %v1173
      %v1175 = vpop.f32.mrb[0].mxu0
      %v1176 = vadd.f32 %v1126, %v1175
      %v1177 = vpop.f32.mrb[0].mxu0
      %v1178 = vpop.f32.mrb[0].mxu0
      %1179 = vdwg.mxu0
      %1180 = vrot.lane.b32.xlu0 %v1053, 15
      %v1181 = vpop.permute.xlu0 %1180
      %1182 = vrot.lane.b32.xlu0 %v1054, 15
      %v1183 = vpop.permute.xlu0 %1182
      %v1184 = vsel %vm542, %v1181, %v1183
      %v1185 = vsel %vm542, %v1183, %v1181
      %v1186 = vsel %vm547, %v1185, 0.0
      %v1187 = vsel %vm548, %v1184, 0.0
      %s1188 = scalar_lea.vmem %s5, 8
      %v1189 = vld [vmem:[%s1188] sm:$0xf]
      %v1190 = vpack.c.bf16 %v1186, %v1186
      %v1191 = vpack.c.bf16 %v1187, %v1187
      %v1193 = vsel %vm1078, %v1189, 0
      %v1196 = vsel %vm1082, %v1190, 0
      %v1199 = vsel %vm1082, %v1191, 0
      %1201 = vmatprep.subr.bf16.mxu0 %v1199
      %1202 = vmatpush1.bf16.msra.mxu0 %v1196
      %1203 = vmatprep.subr.bf16.mxu0 0
      %1204 = vmatpush1.bf16.msra.mxu0 0
      %1205 = vmatprep.subr.bf16.mxu0 0
      %1206 = vmatpush1.bf16.msra.mxu0 0
      %1207 = vmatprep.subr.bf16.mxu0 0
      %1208 = vmatpush1.bf16.msra.mxu0 0
      %1209 = vmatprep.subr.bf16.mxu0 0
      %1210 = vmatpush1.bf16.msra.mxu0 0
      %1211 = vmatprep.subr.bf16.mxu0 0
      %1212 = vmatpush1.bf16.msra.mxu0 0
      %1213 = vmatprep.subr.bf16.mxu0 0
      %1214 = vmatpush1.bf16.msra.mxu0 0
      %1215 = vmatprep.subr.bf16.mxu0 0
      %1216 = vmatpush1.bf16.msra.mxu0 0
      %1217 = vmatprep.subr.bf16.mxu0 0
      %1218 = vmatpush1.bf16.msra.mxu0 0
      %1219 = vmatprep.subr.bf16.mxu0 0
      %1220 = vmatpush1.bf16.msra.mxu0 0
      %1221 = vmatprep.subr.bf16.mxu0 0
      %1222 = vmatpush1.bf16.msra.mxu0 0
      %1223 = vmatprep.subr.bf16.mxu0 0
      %1224 = vmatpush1.bf16.msra.mxu0 0
      %1225 = vmatprep.subr.bf16.mxu0 0
      %1226 = vmatpush1.bf16.msra.mxu0 0
      %1227 = vmatprep.subr.bf16.mxu0 0
      %1228 = vmatpush1.bf16.msra.mxu0 0
      %1229 = vmatprep.subr.bf16.mxu0 0
      %1230 = vmatpush1.bf16.msra.mxu0 0
      %1231 = vmatprep.subr.bf16.mxu0 0
      %1232 = vmatpush1.bf16.msra.mxu0 0
      %1233 = vmatprep.mubr.bf16.mxu0 0
      %1234 = vmatmul.mubr.bf16.gmra.mrb[0].mxu0 %v1193
      %v1235 = vpop.f32.mrb[0].mxu0
      %v1236 = vadd.f32 0.0, %v1235
      %v1237 = vpop.f32.mrb[0].mxu0
      %v1238 = vadd.f32 0.0, %v1237
      %v1239 = vpop.f32.mrb[0].mxu0
      %v1240 = vpop.f32.mrb[0].mxu0
      %1241 = vdwg.mxu0
      %v1242 = vadd.f32 %v1174, %v1236
      %v1243 = vadd.f32 %v1176, %v1238
      %1244 = vrot.lane.b32.xlu0 %v1053, 1
      %v1245 = vpop.permute.xlu0 %1244
      %1246 = vrot.lane.b32.xlu0 %v1054, 1
      %v1247 = vpop.permute.xlu0 %1246
      %v1248 = vsel %vm611, %v1245, %v1247
      %v1249 = vsel %vm611, %v1247, %v1245
      %v1250 = vsel %vm616, %v1249, 0.0
      %v1251 = vsel %vm617, %v1248, 0.0
      %s1252 = scalar_lea.vmem %s5, 12
      %v1253 = vld [vmem:[%s1252] sm:$0xf]
      %v1254 = vpack.c.bf16 %v1250, %v1250
      %v1255 = vpack.c.bf16 %v1251, %v1251
      %v1257 = vsel %vm1078, %v1253, 0
      %v1260 = vsel %vm1082, %v1254, 0
      %v1263 = vsel %vm1082, %v1255, 0
      %1265 = vmatprep.subr.bf16.mxu0 %v1263
      %1266 = vmatpush1.bf16.msra.mxu0 %v1260
      %1267 = vmatprep.subr.bf16.mxu0 0
      %1268 = vmatpush1.bf16.msra.mxu0 0
      %1269 = vmatprep.subr.bf16.mxu0 0
      %1270 = vmatpush1.bf16.msra.mxu0 0
      %1271 = vmatprep.subr.bf16.mxu0 0
      %1272 = vmatpush1.bf16.msra.mxu0 0
      %1273 = vmatprep.subr.bf16.mxu0 0
      %1274 = vmatpush1.bf16.msra.mxu0 0
      %1275 = vmatprep.subr.bf16.mxu0 0
      %1276 = vmatpush1.bf16.msra.mxu0 0
      %1277 = vmatprep.subr.bf16.mxu0 0
      %1278 = vmatpush1.bf16.msra.mxu0 0
      %1279 = vmatprep.subr.bf16.mxu0 0
      %1280 = vmatpush1.bf16.msra.mxu0 0
      %1281 = vmatprep.subr.bf16.mxu0 0
      %1282 = vmatpush1.bf16.msra.mxu0 0
      %1283 = vmatprep.subr.bf16.mxu0 0
      %1284 = vmatpush1.bf16.msra.mxu0 0
      %1285 = vmatprep.subr.bf16.mxu0 0
      %1286 = vmatpush1.bf16.msra.mxu0 0
      %1287 = vmatprep.subr.bf16.mxu0 0
      %1288 = vmatpush1.bf16.msra.mxu0 0
      %1289 = vmatprep.subr.bf16.mxu0 0
      %1290 = vmatpush1.bf16.msra.mxu0 0
      %1291 = vmatprep.subr.bf16.mxu0 0
      %1292 = vmatpush1.bf16.msra.mxu0 0
      %1293 = vmatprep.subr.bf16.mxu0 0
      %1294 = vmatpush1.bf16.msra.mxu0 0
      %1295 = vmatprep.subr.bf16.mxu0 0
      %1296 = vmatpush1.bf16.msra.mxu0 0
      %1297 = vmatprep.mubr.bf16.mxu0 0
      %1298 = vmatmul.mubr.bf16.gmra.mrb[0].mxu0 %v1257
      %v1299 = vpop.f32.mrb[0].mxu0
      %v1300 = vadd.f32 0.0, %v1299
      %v1301 = vpop.f32.mrb[0].mxu0
      %v1302 = vadd.f32 0.0, %v1301
      %v1303 = vpop.f32.mrb[0].mxu0
      %v1304 = vpop.f32.mrb[0].mxu0
      %1305 = vdwg.mxu0
      %v1306 = vadd.f32 %v1242, %v1300
      %v1307 = vadd.f32 %v1243, %v1302
      %s1308 = scalar_lea.vmem %s5, 16
      %v1309 = vld [vmem:[%s1308] sm:$0xf]
      %v1310 = vpack.c.bf16 %v1053, %v1053
      %v1311 = vpack.c.bf16 %v1054, %v1054
      %v1313 = vsel %vm1078, %v1309, 0
      %v1316 = vsel %vm1082, %v1310, 0
      %v1319 = vsel %vm1082, %v1311, 0
      %1321 = vmatprep.subr.bf16.mxu0 %v1319
      %1322 = vmatpush1.bf16.msra.mxu0 %v1316
      %1323 = vmatprep.subr.bf16.mxu0 0
      %1324 = vmatpush1.bf16.msra.mxu0 0
      %1325 = vmatprep.subr.bf16.mxu0 0
      %1326 = vmatpush1.bf16.msra.mxu0 0
      %1327 = vmatprep.subr.bf16.mxu0 0
      %1328 = vmatpush1.bf16.msra.mxu0 0
      %1329 = vmatprep.subr.bf16.mxu0 0
      %1330 = vmatpush1.bf16.msra.mxu0 0
      %1331 = vmatprep.subr.bf16.mxu0 0
      %1332 = vmatpush1.bf16.msra.mxu0 0
      %1333 = vmatprep.subr.bf16.mxu0 0
      %1334 = vmatpush1.bf16.msra.mxu0 0
      %1335 = vmatprep.subr.bf16.mxu0 0
      %1336 = vmatpush1.bf16.msra.mxu0 0
      %1337 = vmatprep.subr.bf16.mxu0 0
      %1338 = vmatpush1.bf16.msra.mxu0 0
      %1339 = vmatprep.subr.bf16.mxu0 0
      %1340 = vmatpush1.bf16.msra.mxu0 0
      %1341 = vmatprep.subr.bf16.mxu0 0
      %1342 = vmatpush1.bf16.msra.mxu0 0
      %1343 = vmatprep.subr.bf16.mxu0 0
      %1344 = vmatpush1.bf16.msra.mxu0 0
      %1345 = vmatprep.subr.bf16.mxu0 0
      %1346 = vmatpush1.bf16.msra.mxu0 0
      %1347 = vmatprep.subr.bf16.mxu0 0
      %1348 = vmatpush1.bf16.msra.mxu0 0
      %1349 = vmatprep.subr.bf16.mxu0 0
      %1350 = vmatpush1.bf16.msra.mxu0 0
      %1351 = vmatprep.subr.bf16.mxu0 0
      %1352 = vmatpush1.bf16.msra.mxu0 0
      %1353 = vmatprep.mubr.bf16.mxu0 0
      %1354 = vmatmul.mubr.bf16.gmra.mrb[0].mxu0 %v1313
      %v1355 = vpop.f32.mrb[0].mxu0
      %v1356 = vadd.f32 0.0, %v1355
      %v1357 = vpop.f32.mrb[0].mxu0
      %v1358 = vadd.f32 0.0, %v1357
      %v1359 = vpop.f32.mrb[0].mxu0
      %v1360 = vpop.f32.mrb[0].mxu0
      %1361 = vdwg.mxu0
      %v1362 = vadd.f32 %v1306, %v1356
      %v1363 = vadd.f32 %v1307, %v1358
      %1364 = vrot.lane.b32.xlu0 %v1053, 127
      %v1365 = vpop.permute.xlu0 %1364
      %1366 = vrot.lane.b32.xlu0 %v1054, 127
      %v1367 = vpop.permute.xlu0 %1366
      %v1368 = vsel %vm736, %v1365, %v1367
      %v1369 = vsel %vm736, %v1367, %v1365
      %v1370 = vsel %vm741, %v1368, 0.0
      %v1371 = vsel %vm742, %v1369, 0.0
      %s1372 = scalar_lea.vmem %s5, 20
      %v1373 = vld [vmem:[%s1372] sm:$0xf]
      %v1374 = vpack.c.bf16 %v1370, %v1370
      %v1375 = vpack.c.bf16 %v1371, %v1371
      %v1377 = vsel %vm1078, %v1373, 0
      %v1380 = vsel %vm1082, %v1374, 0
      %v1383 = vsel %vm1082, %v1375, 0
      %1385 = vmatprep.subr.bf16.mxu0 %v1383
      %1386 = vmatpush1.bf16.msra.mxu0 %v1380
      %1387 = vmatprep.subr.bf16.mxu0 0
      %1388 = vmatpush1.bf16.msra.mxu0 0
      %1389 = vmatprep.subr.bf16.mxu0 0
      %1390 = vmatpush1.bf16.msra.mxu0 0
      %1391 = vmatprep.subr.bf16.mxu0 0
      %1392 = vmatpush1.bf16.msra.mxu0 0
      %1393 = vmatprep.subr.bf16.mxu0 0
      %1394 = vmatpush1.bf16.msra.mxu0 0
      %1395 = vmatprep.subr.bf16.mxu0 0
      %1396 = vmatpush1.bf16.msra.mxu0 0
      %1397 = vmatprep.subr.bf16.mxu0 0
      %1398 = vmatpush1.bf16.msra.mxu0 0
      %1399 = vmatprep.subr.bf16.mxu0 0
      %1400 = vmatpush1.bf16.msra.mxu0 0
      %1401 = vmatprep.subr.bf16.mxu0 0
      %1402 = vmatpush1.bf16.msra.mxu0 0
      %1403 = vmatprep.subr.bf16.mxu0 0
      %1404 = vmatpush1.bf16.msra.mxu0 0
      %1405 = vmatprep.subr.bf16.mxu0 0
      %1406 = vmatpush1.bf16.msra.mxu0 0
      %1407 = vmatprep.subr.bf16.mxu0 0
      %1408 = vmatpush1.bf16.msra.mxu0 0
      %1409 = vmatprep.subr.bf16.mxu0 0
      %1410 = vmatpush1.bf16.msra.mxu0 0
      %1411 = vmatprep.subr.bf16.mxu0 0
      %1412 = vmatpush1.bf16.msra.mxu0 0
      %1413 = vmatprep.subr.bf16.mxu0 0
      %1414 = vmatpush1.bf16.msra.mxu0 0
      %1415 = vmatprep.subr.bf16.mxu0 0
      %1416 = vmatpush1.bf16.msra.mxu0 0
      %1417 = vmatprep.mubr.bf16.mxu0 0
      %1418 = vmatmul.mubr.bf16.gmra.mrb[0].mxu0 %v1377
      %v1419 = vpop.f32.mrb[0].mxu0
      %v1420 = vadd.f32 0.0, %v1419
      %v1421 = vpop.f32.mrb[0].mxu0
      %v1422 = vadd.f32 0.0, %v1421
      %v1423 = vpop.f32.mrb[0].mxu0
      %v1424 = vpop.f32.mrb[0].mxu0
      %1425 = vdwg.mxu0
      %v1426 = vadd.f32 %v1362, %v1420
      %v1427 = vadd.f32 %v1363, %v1422
      %1428 = vrot.lane.b32.xlu0 %v1053, 113
      %v1429 = vpop.permute.xlu0 %1428
      %1430 = vrot.lane.b32.xlu0 %v1054, 113
      %v1431 = vpop.permute.xlu0 %1430
      %v1432 = vsel %vm805, %v1429, %v1431
      %v1433 = vsel %vm805, %v1431, %v1429
      %v1434 = vsel %vm810, %v1432, 0.0
      %v1435 = vsel %vm811, %v1433, 0.0
      %s1436 = scalar_lea.vmem %s5, 24
      %v1437 = vld [vmem:[%s1436] sm:$0xf]
      %v1438 = vpack.c.bf16 %v1434, %v1434
      %v1439 = vpack.c.bf16 %v1435, %v1435
      %v1441 = vsel %vm1078, %v1437, 0
      %v1444 = vsel %vm1082, %v1438, 0
      %v1447 = vsel %vm1082, %v1439, 0
      %1449 = vmatprep.subr.bf16.mxu0 %v1447
      %1450 = vmatpush1.bf16.msra.mxu0 %v1444
      %1451 = vmatprep.subr.bf16.mxu0 0
      %1452 = vmatpush1.bf16.msra.mxu0 0
      %1453 = vmatprep.subr.bf16.mxu0 0
      %1454 = vmatpush1.bf16.msra.mxu0 0
      %1455 = vmatprep.subr.bf16.mxu0 0
      %1456 = vmatpush1.bf16.msra.mxu0 0
      %1457 = vmatprep.subr.bf16.mxu0 0
      %1458 = vmatpush1.bf16.msra.mxu0 0
      %1459 = vmatprep.subr.bf16.mxu0 0
      %1460 = vmatpush1.bf16.msra.mxu0 0
      %1461 = vmatprep.subr.bf16.mxu0 0
      %1462 = vmatpush1.bf16.msra.mxu0 0
      %1463 = vmatprep.subr.bf16.mxu0 0
      %1464 = vmatpush1.bf16.msra.mxu0 0
      %1465 = vmatprep.subr.bf16.mxu0 0
      %1466 = vmatpush1.bf16.msra.mxu0 0
      %1467 = vmatprep.subr.bf16.mxu0 0
      %1468 = vmatpush1.bf16.msra.mxu0 0
      %1469 = vmatprep.subr.bf16.mxu0 0
      %1470 = vmatpush1.bf16.msra.mxu0 0
      %1471 = vmatprep.subr.bf16.mxu0 0
      %1472 = vmatpush1.bf16.msra.mxu0 0
      %1473 = vmatprep.subr.bf16.mxu0 0
      %1474 = vmatpush1.bf16.msra.mxu0 0
      %1475 = vmatprep.subr.bf16.mxu0 0
      %1476 = vmatpush1.bf16.msra.mxu0 0
      %1477 = vmatprep.subr.bf16.mxu0 0
      %1478 = vmatpush1.bf16.msra.mxu0 0
      %1479 = vmatprep.subr.bf16.mxu0 0
      %1480 = vmatpush1.bf16.msra.mxu0 0
      %1481 = vmatprep.mubr.bf16.mxu0 0
      %1482 = vmatmul.mubr.bf16.gmra.mrb[0].mxu0 %v1441
      %v1483 = vpop.f32.mrb[0].mxu0
      %v1484 = vadd.f32 0.0, %v1483
      %v1485 = vpop.f32.mrb[0].mxu0
      %v1486 = vadd.f32 0.0, %v1485
      %v1487 = vpop.f32.mrb[0].mxu0
      %v1488 = vpop.f32.mrb[0].mxu0
      %1489 = vdwg.mxu0
      %v1490 = vadd.f32 %v1426, %v1484
      %v1491 = vadd.f32 %v1427, %v1486
      %1492 = vrot.lane.b32.xlu0 %v1053, 112
      %v1493 = vpop.permute.xlu0 %1492
      %1494 = vrot.lane.b32.xlu0 %v1054, 112
      %v1495 = vpop.permute.xlu0 %1494
      %v1496 = vsel %vm874, %v1493, %v1495
      %v1497 = vsel %vm874, %v1495, %v1493
      %v1498 = vsel %vm879, %v1496, 0.0
      %v1499 = vsel %vm880, %v1497, 0.0
      %s1500 = scalar_lea.vmem %s5, 28
      %v1501 = vld [vmem:[%s1500] sm:$0xf]
      %v1502 = vpack.c.bf16 %v1498, %v1498
      %v1503 = vpack.c.bf16 %v1499, %v1499
      %v1505 = vsel %vm1078, %v1501, 0
      %v1508 = vsel %vm1082, %v1502, 0
      %v1511 = vsel %vm1082, %v1503, 0
      %1513 = vmatprep.subr.bf16.mxu0 %v1511
      %1514 = vmatpush1.bf16.msra.mxu0 %v1508
      %1515 = vmatprep.subr.bf16.mxu0 0
      %1516 = vmatpush1.bf16.msra.mxu0 0
      %1517 = vmatprep.subr.bf16.mxu0 0
      %1518 = vmatpush1.bf16.msra.mxu0 0
      %1519 = vmatprep.subr.bf16.mxu0 0
      %1520 = vmatpush1.bf16.msra.mxu0 0
      %1521 = vmatprep.subr.bf16.mxu0 0
      %1522 = vmatpush1.bf16.msra.mxu0 0
      %1523 = vmatprep.subr.bf16.mxu0 0
      %1524 = vmatpush1.bf16.msra.mxu0 0
      %1525 = vmatprep.subr.bf16.mxu0 0
      %1526 = vmatpush1.bf16.msra.mxu0 0
      %1527 = vmatprep.subr.bf16.mxu0 0
      %1528 = vmatpush1.bf16.msra.mxu0 0
      %1529 = vmatprep.subr.bf16.mxu0 0
      %1530 = vmatpush1.bf16.msra.mxu0 0
      %1531 = vmatprep.subr.bf16.mxu0 0
      %1532 = vmatpush1.bf16.msra.mxu0 0
      %1533 = vmatprep.subr.bf16.mxu0 0
      %1534 = vmatpush1.bf16.msra.mxu0 0
      %1535 = vmatprep.subr.bf16.mxu0 0
      %1536 = vmatpush1.bf16.msra.mxu0 0
      %1537 = vmatprep.subr.bf16.mxu0 0
      %1538 = vmatpush1.bf16.msra.mxu0 0
      %1539 = vmatprep.subr.bf16.mxu0 0
      %1540 = vmatpush1.bf16.msra.mxu0 0
      %1541 = vmatprep.subr.bf16.mxu0 0
      %1542 = vmatpush1.bf16.msra.mxu0 0
      %1543 = vmatprep.subr.bf16.mxu0 0
      %1544 = vmatpush1.bf16.msra.mxu0 0
      %1545 = vmatprep.mubr.bf16.mxu0 0
      %1546 = vmatmul.mubr.bf16.gmra.mrb[0].mxu0 %v1505
      %v1547 = vpop.f32.mrb[0].mxu0
      %v1548 = vadd.f32 0.0, %v1547
      %v1549 = vpop.f32.mrb[0].mxu0
      %v1550 = vadd.f32 0.0, %v1549
      %v1551 = vpop.f32.mrb[0].mxu0
      %v1552 = vpop.f32.mrb[0].mxu0
      %1553 = vdwg.mxu0
      %v1554 = vadd.f32 %v1490, %v1548
      %v1555 = vadd.f32 %v1491, %v1550
      %1556 = vrot.lane.b32.xlu0 %v1053, 111
      %v1557 = vpop.permute.xlu0 %1556
      %1558 = vrot.lane.b32.xlu0 %v1054, 111
      %v1559 = vpop.permute.xlu0 %1558
      %v1560 = vsel %vm943, %v1557, %v1559
      %v1561 = vsel %vm943, %v1559, %v1557
      %v1562 = vsel %vm948, %v1560, 0.0
      %v1563 = vsel %vm949, %v1561, 0.0
      %s1564 = scalar_lea.vmem %s5, 32
      %v1565 = vld [vmem:[%s1564] sm:$0xf]
      %v1566 = vpack.c.bf16 %v1562, %v1562
      %v1567 = vpack.c.bf16 %v1563, %v1563
      %v1569 = vsel %vm1078, %v1565, 0
      %v1572 = vsel %vm1082, %v1566, 0
      %v1575 = vsel %vm1082, %v1567, 0
      %1577 = vmatprep.subr.bf16.mxu0 %v1575
      %1578 = vmatpush1.bf16.msra.mxu0 %v1572
      %1579 = vmatprep.subr.bf16.mxu0 0
      %1580 = vmatpush1.bf16.msra.mxu0 0
      %1581 = vmatprep.subr.bf16.mxu0 0
      %1582 = vmatpush1.bf16.msra.mxu0 0
      %1583 = vmatprep.subr.bf16.mxu0 0
      %1584 = vmatpush1.bf16.msra.mxu0 0
      %1585 = vmatprep.subr.bf16.mxu0 0
      %1586 = vmatpush1.bf16.msra.mxu0 0
      %1587 = vmatprep.subr.bf16.mxu0 0
      %1588 = vmatpush1.bf16.msra.mxu0 0
      %1589 = vmatprep.subr.bf16.mxu0 0
      %1590 = vmatpush1.bf16.msra.mxu0 0
      %1591 = vmatprep.subr.bf16.mxu0 0
      %1592 = vmatpush1.bf16.msra.mxu0 0
      %1593 = vmatprep.subr.bf16.mxu0 0
      %1594 = vmatpush1.bf16.msra.mxu0 0
      %1595 = vmatprep.subr.bf16.mxu0 0
      %1596 = vmatpush1.bf16.msra.mxu0 0
      %1597 = vmatprep.subr.bf16.mxu0 0
      %1598 = vmatpush1.bf16.msra.mxu0 0
      %1599 = vmatprep.subr.bf16.mxu0 0
      %1600 = vmatpush1.bf16.msra.mxu0 0
      %1601 = vmatprep.subr.bf16.mxu0 0
      %1602 = vmatpush1.bf16.msra.mxu0 0
      %1603 = vmatprep.subr.bf16.mxu0 0
      %1604 = vmatpush1.bf16.msra.mxu0 0
      %1605 = vmatprep.subr.bf16.mxu0 0
      %1606 = vmatpush1.bf16.msra.mxu0 0
      %1607 = vmatprep.subr.bf16.mxu0 0
      %1608 = vmatpush1.bf16.msra.mxu0 0
      %1609 = vmatprep.mubr.bf16.mxu0 0
      %1610 = vmatmul.mubr.bf16.gmra.mrb[0].mxu0 %v1569
      %v1611 = vpop.f32.mrb[0].mxu0
      %v1612 = vadd.f32 0.0, %v1611
      %v1613 = vpop.f32.mrb[0].mxu0
      %v1614 = vadd.f32 0.0, %v1613
      %v1615 = vpop.f32.mrb[0].mxu0
      %v1616 = vpop.f32.mrb[0].mxu0
      %1617 = vdwg.mxu0
      %v1618 = vadd.f32 %v1554, %v1612
      %v1619 = vadd.f32 %v1555, %v1614
      %1620 = vset.pattern.permute.xlu0 2
      %1621 = vperm.xlu0 %1620, %v364
      %v1622 = vpop.permute.xlu0 %1621
      %v1624 = vmul.f32 %v1618, %v1622
      %v1625 = vmul.f32 %v1619, %v1622
      %v1626 = vlaneseq
      %v1627 = vshrl.u32 %v1626, 7
      %v1628 = vsub.s32 1, %v1627
      %v1629 = vrot.slane %v362, %v1628
      %v1630 = vlaneseq
      %v1631 = vshrl.u32 %v1630, 7
      %v1632 = vsub.s32 3, %v1631
      %v1633 = vrot.slane %v362, %v1632
      %v1636 = vlaneseq
      %v1637 = vshrl.u32 %v1636, 7
      %v1638 = vsub.s32 1, %v1637
      %v1639 = vrot.slane %v1629, %v1638
      %v1640 = vlaneseq
      %v1641 = vshrl.u32 %v1640, 7
      %v1642 = vsub.s32 1, %v1641
      %v1643 = vrot.slane %v1633, %v1642
      %v1644 = vadd.f32 %v1624, %v1639
      %v1645 = vadd.f32 %v1625, %v1643
      %1646 = vset.pattern.permute.xlu0 1
      %1647 = vperm.xlu0 %1646, %v365
      %v1648 = vpop.permute.xlu0 %1647
      %v1650 = vadd.f32 %v1644, %v1648
      %v1651 = vadd.f32 %v1645, %v1648
      %vm1652 = vcmp.ge.f32.partialorder %v1650, 0.0
      %vm1653 = vcmp.ge.f32.partialorder %v1651, 0.0
      %v1654 = vmul.f32 %v1650, 0.2
      %v1655 = vmul.f32 %v1651, 0.2
      %v1656 = vsel %vm1652, %v1650, %v1654
      %v1657 = vsel %vm1653, %v1651, %v1655
      %v1658 = vld [vmem:[%s6] sm:$0xf]
      %v1660 = vcombine.high %v361, %v361
      %v1662 = vpack.c.bf16 %v361, %v361
      %v1663 = vpack.c.bf16 %v1660, %v1660
      %v1665 = vsel %vm436, %v1658, 0
      %v1668 = vsel %vm440, %v1662, 0
      %v1671 = vsel %vm440, %v1663, 0
      %1673 = vmatprep.subr.bf16.mxu0 %v1671
      %1674 = vmatpush1.bf16.msra.mxu0 %v1668
      %1675 = vmatprep.subr.bf16.mxu0 0
      %1676 = vmatpush1.bf16.msra.mxu0 0
      %1677 = vmatprep.subr.bf16.mxu0 0
      %1678 = vmatpush1.bf16.msra.mxu0 0
      %1679 = vmatprep.subr.bf16.mxu0 0
      %1680 = vmatpush1.bf16.msra.mxu0 0
      %1681 = vmatprep.subr.bf16.mxu0 0
      %1682 = vmatpush1.bf16.msra.mxu0 0
      %1683 = vmatprep.subr.bf16.mxu0 0
      %1684 = vmatpush1.bf16.msra.mxu0 0
      %1685 = vmatprep.subr.bf16.mxu0 0
      %1686 = vmatpush1.bf16.msra.mxu0 0
      %1687 = vmatprep.subr.bf16.mxu0 0
      %1688 = vmatpush1.bf16.msra.mxu0 0
      %1689 = vmatprep.subr.bf16.mxu0 0
      %1690 = vmatpush1.bf16.msra.mxu0 0
      %1691 = vmatprep.subr.bf16.mxu0 0
      %1692 = vmatpush1.bf16.msra.mxu0 0
      %1693 = vmatprep.subr.bf16.mxu0 0
      %1694 = vmatpush1.bf16.msra.mxu0 0
      %1695 = vmatprep.subr.bf16.mxu0 0
      %1696 = vmatpush1.bf16.msra.mxu0 0
      %1697 = vmatprep.subr.bf16.mxu0 0
      %1698 = vmatpush1.bf16.msra.mxu0 0
      %1699 = vmatprep.subr.bf16.mxu0 0
      %1700 = vmatpush1.bf16.msra.mxu0 0
      %1701 = vmatprep.subr.bf16.mxu0 0
      %1702 = vmatpush1.bf16.msra.mxu0 0
      %1703 = vmatprep.subr.bf16.mxu0 0
      %1704 = vmatpush1.bf16.msra.mxu0 0
      %1705 = vmatprep.mubr.bf16.mxu0 0
      %1706 = vmatmul.mubr.bf16.gmra.mrb[0].mxu0 %v1665
      %v1707 = vpop.f32.mrb[0].mxu0
      %v1708 = vadd.f32 0.0, %v1707
      %v1709 = vpop.f32.mrb[0].mxu0
      %v1710 = vadd.f32 0.0, %v1709
      %v1711 = vpop.f32.mrb[0].mxu0
      %v1712 = vpop.f32.mrb[0].mxu0
      %1713 = vdwg.mxu0
      %v1714 = vadd.f32 %v1656, %v1708
      %v1715 = vadd.f32 %v1657, %v1710
      %1716 = vst [vmem:[%s359] sm:$0xff] %v1714
      %1717 = vst [vmem:[%s359 + $0x8] sm:$0xff] %v1715
      %p1718 = scmp.lt.s32.totalorder %s19, 1
      %s1719 = scalar_select %p1718, %s19, 1
      %s1720 = smul.addr %s1719, 2
      %s1721 = smul.addr %s1720, 8
      %s1722 = scalar_lea.vmem %s8, %s1721
      // Predicated region
      $region53: #{styled_res_block.1} parent=51 // pred_check
        %p1723 = pneg %p225
      $region54: #{styled_res_block.1} parent=51 // pred_check_branch
        %1725 = sbr.rel (%p1723) target = $region56
      $region55: #{styled_res_block.1} parent=51 // pred_region
        _
      $region56: #{styled_res_block.1} parent=51 // pred_fallthru
        _
    $region52: #{styled_res_block.1} parent=5 // pred_fallthru
      _
    %p1726 = scmp.le.s32.totalorder 2, %s14
    // Predicated region
    $region57: #{styled_res_block.1} parent=5 // pred_check
      %p1727 = pneg %p1726
    $region58: #{styled_res_block.1} parent=5 // pred_check_branch
      %1729 = sbr.rel (%p1727) target = $region60
    $region59: #{styled_res_block.1} parent=5 // pred_region
      %s1730 = ssub.s32 %s14, 2
      // Predicated region
      $region61: #{styled_res_block.1} parent=59 // pred_check
        %p1731 = pneg %p231
      $region62: #{styled_res_block.1} parent=59 // pred_check_branch
        %1733 = sbr.rel (%p1731) target = $region64
      $region63: #{styled_res_block.1} parent=59 // pred_region
        %p1734 = scmp.lt.s32.totalorder %s20, 1
        %s1735 = scalar_select %p1734, %s20, 1
        %s1736 = smul.addr %s1735, 2
        %s1737 = smul.addr %s1736, 8
        %s1738 = scalar_lea.vmem %s8, %s1737
      $region64: #{styled_res_block.1} parent=59 // pred_fallthru
        _
    $region60: #{styled_res_block.1} parent=5 // pred_fallthru
      _
  $region6: #{styled_res_block.1} parent=0 // loop_footer
    %s18 = sadd.s32 1, %s14
  $region7: #{styled_res_block.1} parent=0 // loop_footer_branch
    %13 = sbr.rel target = $region3
  $region8: #{styled_res_block.1} parent=0 // loop_exit
    _

</llo_original>
